<compile_context>
chip_gen: v7x
topology: tpu7x:2x2x1
jax: 0.10.0
libtpu: 0.0.40
codegen_flags: <defaults>
</compile_context>

<pallas_src>
import jax
import jax.numpy as jnp
from jax.experimental import pallas as pl
from jax.experimental.pallas import tpu as pltpu

ENCODER_OUTPUT_CHANNELS = 16
HIDDEN_LAYER_CHANNELS = 32


# ---------------------------------------------------------------------------
# Fused kernel: conv1(s2,p1)+ReLU -> conv2(s2,p1)+Sigmoid, one image per step.
# ---------------------------------------------------------------------------
def _encoder_kernel(x_ref, w1_ref, b1_ref, w2_ref, b2_ref, o_ref, h_ref):
    # x_ref : (1, 4, Ho2+1, Wp*Cin)  bf16  padded input rows, split by row phase (mod 4)
    # w1_ref: (3, Wp*Cin,  Wo1*C1)   bf16  Toeplitz-expanded conv1 weight, one per kh tap
    # b1_ref: (1, Wo1*C1)            f32
    # w2_ref: (3, Wo1*C1,  Wo2*C2)   bf16  Toeplitz-expanded conv2 weight, one per kh tap
    # b2_ref: (1, Wo2*C2)            f32
    # o_ref : (1, Ho2, Wo2*C2)       f32   output (row-major, Wo2*C2 lanes)
    # h_ref : (2, Ho2+1, Wo1*C1)     bf16  scratch: intermediate rows split by parity,
    #                                       row 0 of each phase is the zero-pad row
    ho2 = o_ref.shape[1]
    n1 = h_ref.shape[2]          # Wo1 * C1 (256)
    n2 = o_ref.shape[2]          # Wo2 * C2 (64)

    # Zero the intermediate scratch (row 0 of the odd phase is conv2's top padding).
    h_ref[...] = jnp.zeros_like(h_ref)

    # ---- conv1 + ReLU: intermediate row r = 2*i + p reads padded input rows
    #      4*i + 2*p + ki  ->  phase (2p+ki) % 4, block offset (2p+ki) // 4. ----
    for p in range(2):
        acc = jnp.broadcast_to(b1_ref[...], (ho2, n1))            # fold bias into init
        for ki in range(3):
            a = (2 * p + ki) % 4
            off = (2 * p + ki) // 4
            xs = x_ref[0, a, off:off + ho2, :]                    # (Ho2, Wp*Cin) bf16
            acc = acc + jnp.dot(xs, w1_ref[ki],
                                preferred_element_type=jnp.float32)
        h = jnp.maximum(acc, 0.0)                                 # ReLU in f32
        h_ref[p, 1:1 + ho2, :] = h.astype(h_ref.dtype)

    # ---- conv2 + Sigmoid: output row r2 reads intermediate rows 2*r2 + ki - 1
    #      -> parity (ki+1) % 2, scratch row offset (ki+1) // 2 (row 0 == zeros). ----
    acc = jnp.broadcast_to(b2_ref[...], (ho2, n2))
    for ki in range(3):
        p = (ki + 1) % 2
        r0 = (ki + 1) // 2
        hs = h_ref[p, r0:r0 + ho2, :]                             # (Ho2, Wo1*C1) bf16
        acc = acc + jnp.dot(hs, w2_ref[ki],
                            preferred_element_type=jnp.float32)
    sig = pl.reciprocal(1.0 + jnp.exp(-acc), approx=True)         # EUP exp + vrcp
    o_ref[0] = sig.astype(o_ref.dtype)


# ---------------------------------------------------------------------------
# Wrapper-side weight transform: stride-2 column sweep folded into the weight.
# ---------------------------------------------------------------------------
def _toeplitz_weight(w, in_cols, out_cols, col_shift):
    """Expand (C_out, C_in, 3, 3) into 3 matrices (in_cols*C_in, out_cols*C_out),
    one per kernel row, so each conv row becomes a single matmul.
    col_shift=0: input columns already spatially padded (conv1).
    col_shift=1: column padding implicit; out-of-range taps dropped (== zero pad)."""
    c_out, c_in, kh, kw = w.shape
    wt = jnp.transpose(w, (2, 3, 1, 0))                  # (kh, kw, C_in, C_out)
    big = jnp.zeros((kh, in_cols * c_in, out_cols * c_out), w.dtype)
    for kj in range(kw):
        for o in range(out_cols):
            c = 2 * o + kj - col_shift
            if 0 <= c < in_cols:
                big = big.at[:, c * c_in:(c + 1) * c_in,
                             o * c_out:(o + 1) * c_out].set(wt[:, kj])
    return big


# ---------------------------------------------------------------------------
# ColorEncoder forward
# ---------------------------------------------------------------------------
def init_params(key):
    k1, k2, k3, k4 = jax.random.split(key, 4)
    w1 = jax.random.normal(k1, (HIDDEN_LAYER_CHANNELS, 3, 3, 3), jnp.float32) * 0.1
    b1 = jax.random.normal(k2, (HIDDEN_LAYER_CHANNELS,), jnp.float32) * 0.1
    w2 = jax.random.normal(k3, (ENCODER_OUTPUT_CHANNELS, HIDDEN_LAYER_CHANNELS, 3, 3),
                           jnp.float32) * 0.1
    b2 = jax.random.normal(k4, (ENCODER_OUTPUT_CHANNELS,), jnp.float32) * 0.1
    return {"w1": w1, "b1": b1, "w2": w2, "b2": b2}


def color_encoder_forward(params, x):
    """x: (N, 3, H, W) float32, NCHW (PyTorch layout).  H, W multiples of 4."""
    n, c_in, h, w = x.shape
    assert h % 4 == 0 and w % 4 == 0, "fused kernel path assumes H, W % 4 == 0"
    c1, c2 = HIDDEN_LAYER_CHANNELS, ENCODER_OUTPUT_CHANNELS
    wo1 = w // 2                       # conv1 output width
    ho2, wo2 = h // 4, w // 4          # conv2 output spatial dims
    wp = w + 2                         # padded width
    hp4 = ho2 + 1                      # number of 4-row input blocks after padding

    # --- boundary layout conversion (done ONCE): NCHW -> NHWC, pad, flatten
    #     each padded row to wp*c_in lanes, split rows into the 4 stride phases.
    xh = jnp.transpose(x, (0, 2, 3, 1))                               # NHWC
    xp = jnp.pad(xh, ((0, 0), (1, 4 * hp4 - h - 1), (1, 1), (0, 0)))  # rows -> 4*hp4
    xp = xp.reshape(n, hp4, 4, wp * c_in)
    xr = jnp.transpose(xp, (0, 2, 1, 3)).astype(jnp.bfloat16)         # (n,4,hp4,wp*c_in)

    # --- Toeplitz-expanded weights (tiny; built once per call) ---------------
    w1 = _toeplitz_weight(params["w1"], wp, wo1, col_shift=0).astype(jnp.bfloat16)
    w2 = _toeplitz_weight(params["w2"], wo1, wo2, col_shift=1).astype(jnp.bfloat16)
    b1 = jnp.tile(params["b1"], wo1)[None, :].astype(jnp.float32)     # (1, wo1*c1)
    b2 = jnp.tile(params["b2"], wo2)[None, :].astype(jnp.float32)     # (1, wo2*c2)

    flops = 2 * n * (2 * 3 * ho2 * (wp * c_in) * (wo1 * c1)
                     + 3 * ho2 * (wo1 * c1) * (wo2 * c2))
    bytes_accessed = (xr.size * 2 + w1.size * 2 + w2.size * 2
                      + b1.size * 4 + b2.size * 4 + n * ho2 * wo2 * c2 * 4)

    out = pl.pallas_call(
        _encoder_kernel,
        out_shape=jax.ShapeDtypeStruct((n, ho2, wo2 * c2), jnp.float32),
        grid=(n,),
        in_specs=[
            pl.BlockSpec((1, 4, hp4, wp * c_in), lambda i: (i, 0, 0, 0)),
            pl.BlockSpec((3, wp * c_in, wo1 * c1), lambda i: (0, 0, 0)),
            pl.BlockSpec((1, wo1 * c1), lambda i: (0, 0)),
            pl.BlockSpec((3, wo1 * c1, wo2 * c2), lambda i: (0, 0, 0)),
            pl.BlockSpec((1, wo2 * c2), lambda i: (0, 0)),
        ],
        out_specs=pl.BlockSpec((1, ho2, wo2 * c2), lambda i: (i, 0, 0)),
        scratch_shapes=[pltpu.VMEM((2, ho2 + 1, wo1 * c1), jnp.bfloat16)],
        compiler_params=pltpu.CompilerParams(
            dimension_semantics=("parallel",),
            vmem_limit_bytes=32 * 1024 * 1024,
        ),
        cost_estimate=pl.CostEstimate(
            flops=flops,
            transcendentals=n * ho2 * wo2 * c2,
            bytes_accessed=bytes_accessed,
        ),
    )(xr, w1, b1, w2, b2)

    out = out.reshape(n, ho2, wo2, c2)
    return jnp.transpose(out, (0, 3, 1, 2))                           # back to NCHW


# ---------------------------------------------------------------------------
# Pure-JAX reference for correctness check
# ---------------------------------------------------------------------------
def _ref_conv(x, w, b, activation):
    out = jax.lax.conv_general_dilated(
        x, w, window_strides=(2, 2), padding=((1, 1), (1, 1)),
        dimension_numbers=("NCHW", "OIHW", "NCHW"),
        precision=jax.lax.Precision.HIGHEST)
    out = out + b[None, :, None, None]
    return jnp.maximum(out, 0.0) if activation == "relu" else jax.nn.sigmoid(out)


def _ref_forward(params, x):
    h = _ref_conv(x, params["w1"], params["b1"], "relu")
    return _ref_conv(h, params["w2"], params["b2"], "sigmoid")


if __name__ == "__main__":
    key = jax.random.PRNGKey(0)
    pkey, xkey = jax.random.split(key)
    params = init_params(pkey)

    # NCHW input, matching PyTorch: batch=2, channels=3, spatial=16x16
    x = jax.random.normal(xkey, (2, 3, 16, 16), jnp.float32)

    fwd = jax.jit(color_encoder_forward)
    y = jax.block_until_ready(fwd(params, x))
    assert y.shape == (2, ENCODER_OUTPUT_CHANNELS, 4, 4), y.shape

    y_ref = jax.block_until_ready(_ref_forward(params, x))
    # bf16 MXU operands (f32 accumulation) + approx reciprocal in the sigmoid:
    # compare at a bf16-appropriate tolerance against the f32 reference.
    max_err = float(jnp.max(jnp.abs(y - y_ref)))
    assert jnp.allclose(y, y_ref, rtol=1e-2, atol=1e-2), max_err

    print("KERNEL_OK")
</pallas_src>

<mosaic_0001>
module attributes {stable_mosaic.version = 11 : i64} {
  func.func @_encoder_kernel(%arg0: i32, %arg1: memref<1x4x5x54xbf16, #tpu.memory_space<vmem>>, %arg2: memref<3x54x256xbf16, #tpu.memory_space<vmem>>, %arg3: memref<1x256xf32, #tpu.memory_space<vmem>>, %arg4: memref<3x256x64xbf16, #tpu.memory_space<vmem>>, %arg5: memref<1x64xf32, #tpu.memory_space<vmem>>, %arg6: memref<1x4x64xf32, #tpu.memory_space<vmem>>, %arg7: memref<2x5x256xbf16, #tpu.memory_space<vmem>>) attributes {dimension_semantics = [#tpu.dimension_semantics<parallel>], iteration_bounds = array<i64: 2>, scalar_prefetch = 0 : i64, scratch_operands = 1 : i64, tpu.core_type = #tpu.core_type<tc>, window_params = [{transform_indices = @transform_0, window_bounds = array<i64: 1, 4, 5, 54>}, {pipeline_mode = #tpu.pipeline_mode<synchronous>, transform_indices = @transform_1, window_bounds = array<i64: 3, 54, 256>}, {pipeline_mode = #tpu.pipeline_mode<synchronous>, transform_indices = @transform_2, window_bounds = array<i64: 1, 256>}, {pipeline_mode = #tpu.pipeline_mode<synchronous>, transform_indices = @transform_3, window_bounds = array<i64: 3, 256, 64>}, {pipeline_mode = #tpu.pipeline_mode<synchronous>, transform_indices = @transform_4, window_bounds = array<i64: 1, 64>}, {transform_indices = @transform_5, window_bounds = array<i64: 1, 4, 64>}]} {
    %cst = arith.constant 0.000000e+00 : bf16
    %0 = vector.broadcast %cst : bf16 to vector<2x5x256xbf16>
    %c0 = arith.constant 0 : index
    %c0_0 = arith.constant 0 : index
    %c0_1 = arith.constant 0 : index
    %1 = vector.load %arg7[%c0, %c0_0, %c0_1] : memref<2x5x256xbf16, #tpu.memory_space<vmem>>, vector<2x5x256xbf16>
    tpu.vector_store %arg7[%c0, %c0_0, %c0_1], %0 {strides = array<i32>} : memref<2x5x256xbf16, #tpu.memory_space<vmem>>, vector<2x5x256xbf16>,
    %c0_2 = arith.constant 0 : index
    %c0_3 = arith.constant 0 : index
    %2 = vector.load %arg3[%c0_2, %c0_3] : memref<1x256xf32, #tpu.memory_space<vmem>>, vector<1x256xf32>
    %3 = vector.shape_cast %2 : vector<1x256xf32> to vector<1x256xf32>
    %4 = vector.broadcast %3 : vector<1x256xf32> to vector<4x256xf32>
    %c0_4 = arith.constant 0 : index
    %c0_5 = arith.constant 0 : index
    %c0_6 = arith.constant 0 : index
    %c0_7 = arith.constant 0 : index
    %5 = vector.load %arg1[%c0_4, %c0_5, %c0_6, %c0_7] : memref<1x4x5x54xbf16, #tpu.memory_space<vmem>>, vector<1x1x4x54xbf16>
    %6 = vector.shape_cast %5 : vector<1x1x4x54xbf16> to vector<4x54xbf16>
    %c0_8 = arith.constant 0 : index
    %c0_9 = arith.constant 0 : index
    %c0_10 = arith.constant 0 : index
    %7 = vector.load %arg2[%c0_8, %c0_9, %c0_10] : memref<3x54x256xbf16, #tpu.memory_space<vmem>>, vector<1x54x256xbf16>
    %8 = vector.shape_cast %7 : vector<1x54x256xbf16> to vector<54x256xbf16>
    %cst_11 = arith.constant dense<0.000000e+00> : vector<4x256xf32>
    %9 = tpu.matmul %6, %8, %cst_11 {dimension_numbers = #tpu.dot_dimension_numbers<[1], [0], [0], [1], [0, 0, 1, 1], [], []>} : vector<4x54xbf16>, vector<54x256xbf16>, vector<4x256xf32> -> vector<4x256xf32>
    %10 = arith.addf %4, %9 : vector<4x256xf32>
    %c0_12 = arith.constant 0 : index
    %c1 = arith.constant 1 : index
    %c0_13 = arith.constant 0 : index
    %c0_14 = arith.constant 0 : index
    %11 = vector.load %arg1[%c0_12, %c1, %c0_13, %c0_14] : memref<1x4x5x54xbf16, #tpu.memory_space<vmem>>, vector<1x1x4x54xbf16>
    %12 = vector.shape_cast %11 : vector<1x1x4x54xbf16> to vector<4x54xbf16>
    %c1_15 = arith.constant 1 : index
    %c0_16 = arith.constant 0 : index
    %c0_17 = arith.constant 0 : index
    %13 = vector.load %arg2[%c1_15, %c0_16, %c0_17] : memref<3x54x256xbf16, #tpu.memory_space<vmem>>, vector<1x54x256xbf16>
    %14 = vector.shape_cast %13 : vector<1x54x256xbf16> to vector<54x256xbf16>
    %cst_18 = arith.constant dense<0.000000e+00> : vector<4x256xf32>
    %15 = tpu.matmul %12, %14, %cst_18 {dimension_numbers = #tpu.dot_dimension_numbers<[1], [0], [0], [1], [0, 0, 1, 1], [], []>} : vector<4x54xbf16>, vector<54x256xbf16>, vector<4x256xf32> -> vector<4x256xf32>
    %16 = arith.addf %10, %15 : vector<4x256xf32>
    %c0_19 = arith.constant 0 : index
    %c2 = arith.constant 2 : index
    %c0_20 = arith.constant 0 : index
    %c0_21 = arith.constant 0 : index
    %17 = vector.load %arg1[%c0_19, %c2, %c0_20, %c0_21] : memref<1x4x5x54xbf16, #tpu.memory_space<vmem>>, vector<1x1x4x54xbf16>
    %18 = vector.shape_cast %17 : vector<1x1x4x54xbf16> to vector<4x54xbf16>
    %c2_22 = arith.constant 2 : index
    %c0_23 = arith.constant 0 : index
    %c0_24 = arith.constant 0 : index
    %19 = vector.load %arg2[%c2_22, %c0_23, %c0_24] : memref<3x54x256xbf16, #tpu.memory_space<vmem>>, vector<1x54x256xbf16>
    %20 = vector.shape_cast %19 : vector<1x54x256xbf16> to vector<54x256xbf16>
    %cst_25 = arith.constant dense<0.000000e+00> : vector<4x256xf32>
    %21 = tpu.matmul %18, %20, %cst_25 {dimension_numbers = #tpu.dot_dimension_numbers<[1], [0], [0], [1], [0, 0, 1, 1], [], []>} : vector<4x54xbf16>, vector<54x256xbf16>, vector<4x256xf32> -> vector<4x256xf32>
    %22 = arith.addf %16, %21 : vector<4x256xf32>
    %cst_26 = arith.constant 0.000000e+00 : f32
    %23 = vector.broadcast %cst_26 : f32 to vector<4x256xf32>
    %24 = arith.maximumf %22, %23 : vector<4x256xf32>
    %25 = arith.truncf %24 : vector<4x256xf32> to vector<4x256xbf16>
    %c0_27 = arith.constant 0 : index
    %c1_28 = arith.constant 1 : index
    %c0_29 = arith.constant 0 : index
    %26 = vector.load %arg7[%c0_27, %c1_28, %c0_29] : memref<2x5x256xbf16, #tpu.memory_space<vmem>>, vector<1x4x256xbf16>
    %27 = vector.shape_cast %26 : vector<1x4x256xbf16> to vector<4x256xbf16>
    %28 = vector.shape_cast %25 : vector<4x256xbf16> to vector<1x4x256xbf16>
    tpu.vector_store %arg7[%c0_27, %c1_28, %c0_29], %28 {strides = array<i32>} : memref<2x5x256xbf16, #tpu.memory_space<vmem>>, vector<1x4x256xbf16>,
    %c0_30 = arith.constant 0 : index
    %c0_31 = arith.constant 0 : index
    %29 = vector.load %arg3[%c0_30, %c0_31] : memref<1x256xf32, #tpu.memory_space<vmem>>, vector<1x256xf32>
    %30 = vector.shape_cast %29 : vector<1x256xf32> to vector<1x256xf32>
    %31 = vector.broadcast %30 : vector<1x256xf32> to vector<4x256xf32>
    %c0_32 = arith.constant 0 : index
    %c2_33 = arith.constant 2 : index
    %c0_34 = arith.constant 0 : index
    %c0_35 = arith.constant 0 : index
    %32 = vector.load %arg1[%c0_32, %c2_33, %c0_34, %c0_35] : memref<1x4x5x54xbf16, #tpu.memory_space<vmem>>, vector<1x1x4x54xbf16>
    %33 = vector.shape_cast %32 : vector<1x1x4x54xbf16> to vector<4x54xbf16>
    %c0_36 = arith.constant 0 : index
    %c0_37 = arith.constant 0 : index
    %c0_38 = arith.constant 0 : index
    %34 = vector.load %arg2[%c0_36, %c0_37, %c0_38] : memref<3x54x256xbf16, #tpu.memory_space<vmem>>, vector<1x54x256xbf16>
    %35 = vector.shape_cast %34 : vector<1x54x256xbf16> to vector<54x256xbf16>
    %cst_39 = arith.constant dense<0.000000e+00> : vector<4x256xf32>
    %36 = tpu.matmul %33, %35, %cst_39 {dimension_numbers = #tpu.dot_dimension_numbers<[1], [0], [0], [1], [0, 0, 1, 1], [], []>} : vector<4x54xbf16>, vector<54x256xbf16>, vector<4x256xf32> -> vector<4x256xf32>
    %37 = arith.addf %31, %36 : vector<4x256xf32>
    %c0_40 = arith.constant 0 : index
    %c3 = arith.constant 3 : index
    %c0_41 = arith.constant 0 : index
    %c0_42 = arith.constant 0 : index
    %38 = vector.load %arg1[%c0_40, %c3, %c0_41, %c0_42] : memref<1x4x5x54xbf16, #tpu.memory_space<vmem>>, vector<1x1x4x54xbf16>
    %39 = vector.shape_cast %38 : vector<1x1x4x54xbf16> to vector<4x54xbf16>
    %c1_43 = arith.constant 1 : index
    %c0_44 = arith.constant 0 : index
    %c0_45 = arith.constant 0 : index
    %40 = vector.load %arg2[%c1_43, %c0_44, %c0_45] : memref<3x54x256xbf16, #tpu.memory_space<vmem>>, vector<1x54x256xbf16>
    %41 = vector.shape_cast %40 : vector<1x54x256xbf16> to vector<54x256xbf16>
    %cst_46 = arith.constant dense<0.000000e+00> : vector<4x256xf32>
    %42 = tpu.matmul %39, %41, %cst_46 {dimension_numbers = #tpu.dot_dimension_numbers<[1], [0], [0], [1], [0, 0, 1, 1], [], []>} : vector<4x54xbf16>, vector<54x256xbf16>, vector<4x256xf32> -> vector<4x256xf32>
    %43 = arith.addf %37, %42 : vector<4x256xf32>
    %c0_47 = arith.constant 0 : index
    %c0_48 = arith.constant 0 : index
    %c1_49 = arith.constant 1 : index
    %c0_50 = arith.constant 0 : index
    %44 = vector.load %arg1[%c0_47, %c0_48, %c1_49, %c0_50] : memref<1x4x5x54xbf16, #tpu.memory_space<vmem>>, vector<1x1x4x54xbf16>
    %45 = vector.shape_cast %44 : vector<1x1x4x54xbf16> to vector<4x54xbf16>
    %c2_51 = arith.constant 2 : index
    %c0_52 = arith.constant 0 : index
    %c0_53 = arith.constant 0 : index
    %46 = vector.load %arg2[%c2_51, %c0_52, %c0_53] : memref<3x54x256xbf16, #tpu.memory_space<vmem>>, vector<1x54x256xbf16>
    %47 = vector.shape_cast %46 : vector<1x54x256xbf16> to vector<54x256xbf16>
    %cst_54 = arith.constant dense<0.000000e+00> : vector<4x256xf32>
    %48 = tpu.matmul %45, %47, %cst_54 {dimension_numbers = #tpu.dot_dimension_numbers<[1], [0], [0], [1], [0, 0, 1, 1], [], []>} : vector<4x54xbf16>, vector<54x256xbf16>, vector<4x256xf32> -> vector<4x256xf32>
    %49 = arith.addf %43, %48 : vector<4x256xf32>
    %cst_55 = arith.constant 0.000000e+00 : f32
    %50 = vector.broadcast %cst_55 : f32 to vector<4x256xf32>
    %51 = arith.maximumf %49, %50 : vector<4x256xf32>
    %52 = arith.truncf %51 : vector<4x256xf32> to vector<4x256xbf16>
    %c1_56 = arith.constant 1 : index
    %c1_57 = arith.constant 1 : index
    %c0_58 = arith.constant 0 : index
    %53 = vector.load %arg7[%c1_56, %c1_57, %c0_58] : memref<2x5x256xbf16, #tpu.memory_space<vmem>>, vector<1x4x256xbf16>
    %54 = vector.shape_cast %53 : vector<1x4x256xbf16> to vector<4x256xbf16>
    %55 = vector.shape_cast %52 : vector<4x256xbf16> to vector<1x4x256xbf16>
    tpu.vector_store %arg7[%c1_56, %c1_57, %c0_58], %55 {strides = array<i32>} : memref<2x5x256xbf16, #tpu.memory_space<vmem>>, vector<1x4x256xbf16>,
    %c0_59 = arith.constant 0 : index
    %c0_60 = arith.constant 0 : index
    %56 = vector.load %arg5[%c0_59, %c0_60] : memref<1x64xf32, #tpu.memory_space<vmem>>, vector<1x64xf32>
    %57 = vector.shape_cast %56 : vector<1x64xf32> to vector<1x64xf32>
    %58 = vector.broadcast %57 : vector<1x64xf32> to vector<4x64xf32>
    %c1_61 = arith.constant 1 : index
    %c0_62 = arith.constant 0 : index
    %c0_63 = arith.constant 0 : index
    %59 = vector.load %arg7[%c1_61, %c0_62, %c0_63] : memref<2x5x256xbf16, #tpu.memory_space<vmem>>, vector<1x4x256xbf16>
    %60 = vector.shape_cast %59 : vector<1x4x256xbf16> to vector<4x256xbf16>
    %c0_64 = arith.constant 0 : index
    %c0_65 = arith.constant 0 : index
    %c0_66 = arith.constant 0 : index
    %61 = vector.load %arg4[%c0_64, %c0_65, %c0_66] : memref<3x256x64xbf16, #tpu.memory_space<vmem>>, vector<1x256x64xbf16>
    %62 = vector.shape_cast %61 : vector<1x256x64xbf16> to vector<256x64xbf16>
    %cst_67 = arith.constant dense<0.000000e+00> : vector<4x64xf32>
    %63 = tpu.matmul %60, %62, %cst_67 {dimension_numbers = #tpu.dot_dimension_numbers<[1], [0], [0], [1], [0, 0, 1, 1], [], []>} : vector<4x256xbf16>, vector<256x64xbf16>, vector<4x64xf32> -> vector<4x64xf32>
    %64 = arith.addf %58, %63 : vector<4x64xf32>
    %c0_68 = arith.constant 0 : index
    %c1_69 = arith.constant 1 : index
    %c0_70 = arith.constant 0 : index
    %65 = vector.load %arg7[%c0_68, %c1_69, %c0_70] : memref<2x5x256xbf16, #tpu.memory_space<vmem>>, vector<1x4x256xbf16>
    %66 = vector.shape_cast %65 : vector<1x4x256xbf16> to vector<4x256xbf16>
    %c1_71 = arith.constant 1 : index
    %c0_72 = arith.constant 0 : index
    %c0_73 = arith.constant 0 : index
    %67 = vector.load %arg4[%c1_71, %c0_72, %c0_73] : memref<3x256x64xbf16, #tpu.memory_space<vmem>>, vector<1x256x64xbf16>
    %68 = vector.shape_cast %67 : vector<1x256x64xbf16> to vector<256x64xbf16>
    %cst_74 = arith.constant dense<0.000000e+00> : vector<4x64xf32>
    %69 = tpu.matmul %66, %68, %cst_74 {dimension_numbers = #tpu.dot_dimension_numbers<[1], [0], [0], [1], [0, 0, 1, 1], [], []>} : vector<4x256xbf16>, vector<256x64xbf16>, vector<4x64xf32> -> vector<4x64xf32>
    %70 = arith.addf %64, %69 : vector<4x64xf32>
    %c1_75 = arith.constant 1 : index
    %c1_76 = arith.constant 1 : index
    %c0_77 = arith.constant 0 : index
    %71 = vector.load %arg7[%c1_75, %c1_76, %c0_77] : memref<2x5x256xbf16, #tpu.memory_space<vmem>>, vector<1x4x256xbf16>
    %72 = vector.shape_cast %71 : vector<1x4x256xbf16> to vector<4x256xbf16>
    %c2_78 = arith.constant 2 : index
    %c0_79 = arith.constant 0 : index
    %c0_80 = arith.constant 0 : index
    %73 = vector.load %arg4[%c2_78, %c0_79, %c0_80] : memref<3x256x64xbf16, #tpu.memory_space<vmem>>, vector<1x256x64xbf16>
    %74 = vector.shape_cast %73 : vector<1x256x64xbf16> to vector<256x64xbf16>
    %cst_81 = arith.constant dense<0.000000e+00> : vector<4x64xf32>
    %75 = tpu.matmul %72, %74, %cst_81 {dimension_numbers = #tpu.dot_dimension_numbers<[1], [0], [0], [1], [0, 0, 1, 1], [], []>} : vector<4x256xbf16>, vector<256x64xbf16>, vector<4x64xf32> -> vector<4x64xf32>
    %76 = arith.addf %70, %75 : vector<4x64xf32>
    %cst_82 = arith.constant 0.000000e+00 : f32
    %77 = vector.broadcast %cst_82 : f32 to vector<4x64xf32>
    %78 = arith.subf %77, %76 : vector<4x64xf32>
    %79 = math.exp %78 : vector<4x64xf32>
    %cst_83 = arith.constant 1.000000e+00 : f32
    %80 = vector.broadcast %cst_83 : f32 to vector<4x64xf32>
    %81 = arith.addf %80, %79 : vector<4x64xf32>
    %82 = tpu.reciprocal %81 {approx = true} : vector<4x64xf32> -> vector<4x64xf32>
    %c0_84 = arith.constant 0 : index
    %c0_85 = arith.constant 0 : index
    %c0_86 = arith.constant 0 : index
    %83 = vector.load %arg6[%c0_84, %c0_85, %c0_86] : memref<1x4x64xf32, #tpu.memory_space<vmem>>, vector<1x4x64xf32>
    %84 = vector.shape_cast %83 : vector<1x4x64xf32> to vector<4x64xf32>
    %85 = vector.shape_cast %82 : vector<4x64xf32> to vector<1x4x64xf32>
    tpu.vector_store %arg6[%c0_84, %c0_85, %c0_86], %85 {strides = array<i32>} : memref<1x4x64xf32, #tpu.memory_space<vmem>>, vector<1x4x64xf32>,
    return
  }
  func.func @transform_0(%arg0: i32) -> (i32, i32, i32, i32) {
    %c0_i32 = arith.constant 0 : i32
    %c0_i32_0 = arith.constant 0 : i32
    %c0_i32_1 = arith.constant 0 : i32
    %c0_i32_2 = arith.constant 0 : i32
    return %arg0, %c0_i32, %c0_i32_0, %c0_i32_1 : i32, i32, i32, i32
  }
  func.func @transform_1(%arg0: i32) -> (i32, i32, i32) {
    %c0_i32 = arith.constant 0 : i32
    %c0_i32_0 = arith.constant 0 : i32
    %c0_i32_1 = arith.constant 0 : i32
    %c0_i32_2 = arith.constant 0 : i32
    return %c0_i32, %c0_i32_0, %c0_i32_1 : i32, i32, i32
  }
  func.func @transform_2(%arg0: i32) -> (i32, i32) {
    %c0_i32 = arith.constant 0 : i32
    %c0_i32_0 = arith.constant 0 : i32
    %c0_i32_1 = arith.constant 0 : i32
    return %c0_i32, %c0_i32_0 : i32, i32
  }
  func.func @transform_3(%arg0: i32) -> (i32, i32, i32) {
    %c0_i32 = arith.constant 0 : i32
    %c0_i32_0 = arith.constant 0 : i32
    %c0_i32_1 = arith.constant 0 : i32
    %c0_i32_2 = arith.constant 0 : i32
    return %c0_i32, %c0_i32_0, %c0_i32_1 : i32, i32, i32
  }
  func.func @transform_4(%arg0: i32) -> (i32, i32) {
    %c0_i32 = arith.constant 0 : i32
    %c0_i32_0 = arith.constant 0 : i32
    %c0_i32_1 = arith.constant 0 : i32
    return %c0_i32, %c0_i32_0 : i32, i32
  }
  func.func @transform_5(%arg0: i32) -> (i32, i32, i32) {
    %c0_i32 = arith.constant 0 : i32
    %c0_i32_0 = arith.constant 0 : i32
    %c0_i32_1 = arith.constant 0 : i32
    return %arg0, %c0_i32, %c0_i32_0 : i32, i32, i32
  }
}

</mosaic_0001>

<llo_original>
// kernel: tile.13
$region0: #{tile.13}
  #allocation0 [shape = 's32[1]{0}', space=sflag, size = 0x4, scoped, tag = 'scoped memory for tile.13']
  %s0 = inlined_call_operand.vmem [shape: f32[32], index: 0, kind: input, shape index: {}]
  %s1 = inlined_call_operand.vmem [shape: f32[8,32], index: 1, kind: output, shape index: {}]
  // Predicated region
  $region2: #{tile.13} parent=0 // pred_check
    _
  $region3: #{tile.13} parent=0 // pred_check_branch
    %3 = sbr.rel (0) target = $region5
  $region4: #{tile.13} parent=0 // pred_region
    _
  $region5: #{tile.13} parent=0 // pred_fallthru
    _
  %v4 = vld [vmem:[%s0] ss:$0 sm:$0xff]
  %5 = vst [vmem:[%s1] sm:$0xff] %v4

// kernel: tile.14
$region0: #{tile.14}
  %s0 = inlined_call_operand.vmem [shape: f32[8,32], index: 0, kind: input, shape index: {}]
  %s1 = inlined_call_operand.vmem [shape: f32[1,256], index: 1, kind: output, shape index: {}]
  $region1: #{tile.14} parent=0
    #allocation0 [shape = 'u8[8192]{0}', space=vmem, size = 0x2000, scoped, tag = 'scoped mem for output reshape']
    %s2 = smov 3
    %v3 = vld [vmem:[%s0] ss:$4 sm:%s2]
    %vm4 = vcmask 261120
    %5 = vst.msk [vmem:[#allocation0] ss:$8 sm:$0x3] %vm4, %v3
    %s6 = scalar_lea.vmem %s0, 3
    %s7 = smov 3
    %v8 = vld [vmem:[%s6] ss:$4 sm:%s7]
    %9 = vrot.lane.b32.xlu0 %v8, 96
    %v10 = vpop.permute.xlu0 %9
    %vm11 = vcmask 1048320
    %12 = vst.msk [vmem:[#allocation0] ss:$8 sm:$0x3] %vm11, %v10
    %s13 = scalar_lea.vmem %s0, 2
    %s14 = smov 3
    %v15 = vld [vmem:[%s13] ss:$4 sm:%s14]
    %16 = vrot.lane.b32.xlu0 %v15, 64
    %v17 = vpop.permute.xlu0 %16
    %vm18 = vcmask 785920
    %19 = vst.msk [vmem:[#allocation0] ss:$8 sm:$0x3] %vm18, %v17
    %s20 = scalar_lea.vmem %s0, 1
    %s21 = smov 3
    %v22 = vld [vmem:[%s20] ss:$4 sm:%s21]
    %23 = vrot.lane.b32.xlu0 %v22, 32
    %v24 = vpop.permute.xlu0 %23
    %vm25 = vcmask 523520
    %26 = vst.msk [vmem:[#allocation0] ss:$8 sm:$0x3] %vm25, %v24
    %s28 = sshllo.u32 0, 1
    %v30 = vld [vmem:[#allocation0] sm:%s28]
    %s31 = sshllo.u32 0, 1
    %32 = vst [vmem:[%s1] sm:%s31] %v30
    %s33 = scalar_lea.vmem [#allocation0], 8
    %v34 = vld [vmem:[%s33] sm:%s28]
    %s35 = sshllo.u32 0, 1
    %s36 = scalar_lea.vmem %s1, 1
    %37 = vst [vmem:[%s36] sm:%s35] %v34

// kernel: tile.18
$region0: #{tile.18}
  #allocation0 [shape = 's32[1]{0}', space=sflag, size = 0x4, scoped, tag = 'scoped memory for tile.18']
  %s0 = inlined_call_operand.vmem [shape: f32[16], index: 0, kind: input, shape index: {}]
  %s1 = inlined_call_operand.vmem [shape: f32[4,16], index: 1, kind: output, shape index: {}]
  // Predicated region
  $region2: #{tile.18} parent=0 // pred_check
    _
  $region3: #{tile.18} parent=0 // pred_check_branch
    %3 = sbr.rel (0) target = $region5
  $region4: #{tile.18} parent=0 // pred_region
    _
  $region5: #{tile.18} parent=0 // pred_fallthru
    _
  %v4 = vld [vmem:[%s0] ss:$0 sm:$0xff]
  %5 = vst [vmem:[%s1] sm:$0xf] %v4

// kernel: tile.19
$region0: #{tile.19}
  %s0 = inlined_call_operand.vmem [shape: f32[4,16], index: 0, kind: input, shape index: {}]
  %s1 = inlined_call_operand.vmem [shape: f32[1,64], index: 1, kind: output, shape index: {}]
  $region1: #{tile.19} parent=0
    #allocation0 [shape = 'u8[4096]{0}', space=vmem, size = 0x1000, scoped, tag = 'scoped mem for output reshape']
    #allocation1 [shape = 'u8[4096]{0}', space=vmem, size = 0x1000, scoped, tag = 'scoped mem for input reshape']
    %s3 = sshllo.u32 0, 4
    %v4 = vld [vmem:[%s0] sm:%s3]
    %5 = vst [vmem:[#allocation1] sm:%s3] %v4
    %v6 = vld [vmem:[#allocation1] sm:$0x1]
    %vm7 = vcmask 130048
    %8 = vst.msk [vmem:[#allocation0] sm:$0x1] %vm7, %v6
    %s9 = scalar_lea.vmem [#allocation1], 3
    %v10 = vld [vmem:[%s9] sm:$0x1]
    %11 = vrot.lane.b32.xlu0 %v10, 48
    %v12 = vpop.permute.xlu0 %11
    %vm13 = vcmask 523648
    %14 = vst.msk [vmem:[#allocation0] sm:$0x1] %vm13, %v12
    %s15 = scalar_lea.vmem [#allocation1], 2
    %v16 = vld [vmem:[%s15] sm:$0x1]
    %17 = vrot.lane.b32.xlu0 %v16, 32
    %v18 = vpop.permute.xlu0 %17
    %vm19 = vcmask 392448
    %20 = vst.msk [vmem:[#allocation0] sm:$0x1] %vm19, %v18
    %s21 = scalar_lea.vmem [#allocation1], 1
    %v22 = vld [vmem:[%s21] sm:$0x1]
    %23 = vrot.lane.b32.xlu0 %v22, 16
    %v24 = vpop.permute.xlu0 %23
    %vm25 = vcmask 261248
    %26 = vst.msk [vmem:[#allocation0] sm:$0x1] %vm25, %v24
    %s28 = sshllo.u32 0, 1
    %v30 = vld [vmem:[#allocation0] sm:%s28]
    %s31 = sshllo.u32 0, 1
    %32 = vst [vmem:[%s1] sm:%s31] %v30

// kernel: color_encoder_forward.1
$region0: #{color_encoder_forward.1}
  #allocation0 [shape = 'u32[]', space=smem, size = 0x4, offset = 0x4, fixed_abs, tag = 'smem constant byte address 0x4 - core index']
  #allocation1 [shape = 'u32[144,128]{1,0:T(1,128)}', space=vmem, size = 0x12000, scoped, tag = 'internal scratch']
  #allocation2 [shape = 'bf16[2,5,256]{2,1,0:T(8,128)(2,1)}', space=vmem, size = 0x2000, scoped, tag = 'scratch operand']
  %s0 = inlined_call_operand.vmem [shape: bf16[2,4,5,54], index: 0, kind: input, shape index: {}]
  %s1 = inlined_call_operand.vmem [shape: bf16[3,54,256], index: 1, kind: input, shape index: {}]
  %s2 = inlined_call_operand.vmem [shape: f32[1,256], index: 2, kind: input, shape index: {}]
  %s3 = inlined_call_operand.vmem [shape: bf16[3,256,64], index: 3, kind: input, shape index: {}]
  %s4 = inlined_call_operand.vmem [shape: f32[1,64], index: 4, kind: input, shape index: {}]
  %s5 = inlined_call_operand.vmem [shape: f32[2,4,64], index: 5, kind: output, shape index: {}]
  %s6 = sld [smem:[#allocation0]]
  $region53: #{color_encoder_forward.1} parent=0
    _
  %s8 = ssub.s32 1, %s6
  %s9 = scalar_select 0, %s8, %s6
  loop: start=0, step=1, limit=4
  $region2: #{color_encoder_forward.1} parent=0 // loop_pre_header
    _
  $region3: #{color_encoder_forward.1} parent=0 // loop_header
    %s11 = sphi 0, %s15
    %p12 = scmp.ge.s32.totalorder %s11, 4
    %s21 = sphi 0, %s23
    %s24 = sphi 0, %s21
    %s25 = sphi 0, %s24
    %s41 = sphi 0, %s25
    %s45 = sphi 0, %s45
    %s47 = sphi 0, %s45
    %s48 = sphi 0, %s47
    %s62 = sphi 0, %s48
    %s66 = sphi 0, %s66
    %s68 = sphi 0, %s66
    %s69 = sphi 0, %s68
    %s83 = sphi 0, %s69
    %s87 = sphi 0, %s87
    %s89 = sphi 0, %s87
    %s90 = sphi 0, %s89
    %s104 = sphi 0, %s90
    %s108 = sphi 0, %s108
    %s110 = sphi 0, %s108
    %s111 = sphi 0, %s110
    %s125 = sphi 0, %s111
    %s131 = sphi 0, %s133
    %s134 = sphi 0, %s131
    %s135 = sphi 0, %s134
    %s151 = sphi 0, %s135
  $region4: #{color_encoder_forward.1} parent=0 // loop_header_branch
    %14 = sbr.rel (%p12) target = $region8
  $region5: #{color_encoder_forward.1} parent=0 // loop_body
    %s16 = ssub.s32 %s11, 1
    %s17 = ssub.s32 %s11, 2
    %s18 = sadd.s32 %s11, 1
    %s19 = ssub.s32 %s11, %s18
    %p20 = scmp.eq.s32.totalorder %s19, 0
    %s22 = sadd.s32 %s21, 1
    %s23 = scalar_select %p20, %s21, %s22
    %p26 = pneg %p20
    %p27 = scmp.eq.s32.totalorder %s11, 1
    %p28 = por %p26, %p27
    %p29 = scmp.ne.s32.totalorder %s21, %s24
    %p30 = scmp.eq.s32.totalorder %s11, 0
    %p31 = por %p29, %p30
    %p32 = scmp.ne.s32.totalorder %s21, %s24
    %p33 = scmp.eq.s32.totalorder %s16, 1
    %p34 = por %p32, %p33
    %p35 = scmp.ne.s32.totalorder %s24, %s25
    %p36 = scmp.eq.s32.totalorder %s16, 0
    %p37 = por %p35, %p36
    %p38 = scmp.ne.s32.totalorder %s24, %s25
    %p39 = scmp.eq.s32.totalorder %s17, 1
    %p40 = por %p38, %p39
    %p42 = scmp.ne.s32.totalorder %s25, %s41
    %p43 = scmp.eq.s32.totalorder %s17, 0
    %p44 = por %p42, %p43
    %s46 = sadd.s32 %s45, 1
    %p49 = scmp.eq.s32.totalorder %s11, 1
    %p50 = scmp.ne.s32.totalorder %s45, %s47
    %p51 = scmp.eq.s32.totalorder %s11, 0
    %p52 = por %p50, %p51
    %p53 = scmp.ne.s32.totalorder %s45, %s47
    %p54 = scmp.eq.s32.totalorder %s16, 1
    %p55 = por %p53, %p54
    %p56 = scmp.ne.s32.totalorder %s47, %s48
    %p57 = scmp.eq.s32.totalorder %s16, 0
    %p58 = por %p56, %p57
    %p59 = scmp.ne.s32.totalorder %s47, %s48
    %p60 = scmp.eq.s32.totalorder %s17, 1
    %p61 = por %p59, %p60
    %p63 = scmp.ne.s32.totalorder %s48, %s62
    %p64 = scmp.eq.s32.totalorder %s17, 0
    %p65 = por %p63, %p64
    %s67 = sadd.s32 %s66, 1
    %p70 = scmp.eq.s32.totalorder %s11, 1
    %p71 = scmp.ne.s32.totalorder %s66, %s68
    %p72 = scmp.eq.s32.totalorder %s11, 0
    %p73 = por %p71, %p72
    %p74 = scmp.ne.s32.totalorder %s66, %s68
    %p75 = scmp.eq.s32.totalorder %s16, 1
    %p76 = por %p74, %p75
    %p77 = scmp.ne.s32.totalorder %s68, %s69
    %p78 = scmp.eq.s32.totalorder %s16, 0
    %p79 = por %p77, %p78
    %p80 = scmp.ne.s32.totalorder %s68, %s69
    %p81 = scmp.eq.s32.totalorder %s17, 1
    %p82 = por %p80, %p81
    %p84 = scmp.ne.s32.totalorder %s69, %s83
    %p85 = scmp.eq.s32.totalorder %s17, 0
    %p86 = por %p84, %p85
    %s88 = sadd.s32 %s87, 1
    %p91 = scmp.eq.s32.totalorder %s11, 1
    %p92 = scmp.ne.s32.totalorder %s87, %s89
    %p93 = scmp.eq.s32.totalorder %s11, 0
    %p94 = por %p92, %p93
    %p95 = scmp.ne.s32.totalorder %s87, %s89
    %p96 = scmp.eq.s32.totalorder %s16, 1
    %p97 = por %p95, %p96
    %p98 = scmp.ne.s32.totalorder %s89, %s90
    %p99 = scmp.eq.s32.totalorder %s16, 0
    %p100 = por %p98, %p99
    %p101 = scmp.ne.s32.totalorder %s89, %s90
    %p102 = scmp.eq.s32.totalorder %s17, 1
    %p103 = por %p101, %p102
    %p105 = scmp.ne.s32.totalorder %s90, %s104
    %p106 = scmp.eq.s32.totalorder %s17, 0
    %p107 = por %p105, %p106
    %s109 = sadd.s32 %s108, 1
    %p112 = scmp.eq.s32.totalorder %s11, 1
    %p113 = scmp.ne.s32.totalorder %s108, %s110
    %p114 = scmp.eq.s32.totalorder %s11, 0
    %p115 = por %p113, %p114
    %p116 = scmp.ne.s32.totalorder %s108, %s110
    %p117 = scmp.eq.s32.totalorder %s16, 1
    %p118 = por %p116, %p117
    %p119 = scmp.ne.s32.totalorder %s110, %s111
    %p120 = scmp.eq.s32.totalorder %s16, 0
    %p121 = por %p119, %p120
    %p122 = scmp.ne.s32.totalorder %s110, %s111
    %p123 = scmp.eq.s32.totalorder %s17, 1
    %p124 = por %p122, %p123
    %p126 = scmp.ne.s32.totalorder %s111, %s125
    %p127 = scmp.eq.s32.totalorder %s17, 0
    %p128 = por %p126, %p127
    %s129 = ssub.s32 %s11, %s18
    %p130 = scmp.eq.s32.totalorder %s129, 0
    %s132 = sadd.s32 %s131, 1
    %s133 = scalar_select %p130, %s131, %s132
    %p136 = pneg %p130
    %p137 = scmp.eq.s32.totalorder %s11, 1
    %p138 = por %p136, %p137
    %p139 = scmp.ne.s32.totalorder %s131, %s134
    %p140 = scmp.eq.s32.totalorder %s11, 0
    %p141 = por %p139, %p140
    %p142 = scmp.ne.s32.totalorder %s131, %s134
    %p143 = scmp.eq.s32.totalorder %s16, 1
    %p144 = por %p142, %p143
    %p145 = scmp.ne.s32.totalorder %s134, %s135
    %p146 = scmp.eq.s32.totalorder %s16, 0
    %p147 = por %p145, %p146
    %p148 = scmp.ne.s32.totalorder %s134, %s135
    %p149 = scmp.eq.s32.totalorder %s17, 1
    %p150 = por %p148, %p149
    %p152 = scmp.ne.s32.totalorder %s135, %s151
    %p153 = scmp.eq.s32.totalorder %s17, 0
    %p154 = por %p152, %p153
    %p155 = scmp.le.s32.totalorder 1, %s11
    %p156 = scmp.lt.s32.totalorder %s11, 3
    %p157 = pnand %p155, %p156
    %p158 = pneg %p157
    // Predicated region
    $region9: #{color_encoder_forward.1} parent=5 // pred_check
      _
    $region10: #{color_encoder_forward.1} parent=5 // pred_check_branch
      %160 = sbr.rel (%p157) target = $region12
    $region11: #{color_encoder_forward.1} parent=5 // pred_region
      %s161 = ssub.s32 %s11, 1
      // Predicated region
      $region13: #{color_encoder_forward.1} parent=11 // pred_check
        %p162 = pneg %p58
      $region14: #{color_encoder_forward.1} parent=11 // pred_check_branch
        %164 = sbr.rel (%p162) target = $region16
      $region15: #{color_encoder_forward.1} parent=11 // pred_region
        _
      $region16: #{color_encoder_forward.1} parent=11 // pred_fallthru
        _
      // Predicated region
      $region17: #{color_encoder_forward.1} parent=11 // pred_check
        %p165 = pneg %p79
      $region18: #{color_encoder_forward.1} parent=11 // pred_check_branch
        %167 = sbr.rel (%p165) target = $region20
      $region19: #{color_encoder_forward.1} parent=11 // pred_region
        _
      $region20: #{color_encoder_forward.1} parent=11 // pred_fallthru
        _
      // Predicated region
      $region21: #{color_encoder_forward.1} parent=11 // pred_check
        %p168 = pneg %p100
      $region22: #{color_encoder_forward.1} parent=11 // pred_check_branch
        %170 = sbr.rel (%p168) target = $region24
      $region23: #{color_encoder_forward.1} parent=11 // pred_region
        _
      $region24: #{color_encoder_forward.1} parent=11 // pred_fallthru
        _
      // Predicated region
      $region25: #{color_encoder_forward.1} parent=11 // pred_check
        %p171 = pneg %p121
      $region26: #{color_encoder_forward.1} parent=11 // pred_check_branch
        %173 = sbr.rel (%p171) target = $region28
      $region27: #{color_encoder_forward.1} parent=11 // pred_region
        _
      $region28: #{color_encoder_forward.1} parent=11 // pred_fallthru
        _
    $region12: #{color_encoder_forward.1} parent=5 // pred_fallthru
      _
    %p174 = scmp.lt.s32.totalorder %s11, 2
    // Predicated region
    $region29: #{color_encoder_forward.1} parent=5 // pred_check
      %p175 = pneg %p174
    $region30: #{color_encoder_forward.1} parent=5 // pred_check_branch
      %177 = sbr.rel (%p175) target = $region32
    $region31: #{color_encoder_forward.1} parent=5 // pred_region
      // Predicated region
      $region33: #{color_encoder_forward.1} parent=31 // pred_check
        %p178 = pneg %p31
      $region34: #{color_encoder_forward.1} parent=31 // pred_check_branch
        %180 = sbr.rel (%p178) target = $region36
      $region35: #{color_encoder_forward.1} parent=31 // pred_region
        %p181 = scmp.lt.s32.totalorder %s11, 1
        %s182 = scalar_select %p181, %s11, 1
        %s183 = smul.addr %s182, 4
        %s184 = smul.addr %s183, 4
        %s185 = scalar_lea.vmem %s0, %s184
      $region36: #{color_encoder_forward.1} parent=31 // pred_fallthru
        _
    $region32: #{color_encoder_forward.1} parent=5 // pred_fallthru
      _
    %p186 = scmp.le.s32.totalorder 1, %s11
    %p187 = scmp.lt.s32.totalorder %s11, 3
    %p188 = pnand %p186, %p187
    %p189 = pneg %p188
    // Predicated region
    $region37: #{color_encoder_forward.1} parent=5 // pred_check
      _
    $region38: #{color_encoder_forward.1} parent=5 // pred_check_branch
      %191 = sbr.rel (%p188) target = $region40
    $region39: #{color_encoder_forward.1} parent=5 // pred_region
      %s192 = ssub.s32 %s11, 1
      %p193 = scmp.lt.s32.totalorder %s16, 1
      %s194 = scalar_select %p193, %s16, 1
      %s195 = smul.addr %s194, 4
      %s196 = smul.addr %s195, 4
      %s197 = scalar_lea.vmem %s0, %s196
      %p198 = pneg %p37
      %p199 = pneg %p34
      %p200 = pneg %p58
      %p201 = pneg %p55
      %p202 = pneg %p79
      %p203 = pneg %p76
      %p204 = pneg %p100
      %p205 = pneg %p97
      %p206 = pneg %p121
      %p207 = pneg %p118
      %p208 = pneg %p147
      %p209 = pneg %p144
      %p210 = scmp.lt.s32.totalorder %s16, 1
      %s211 = scalar_select %p210, %s16, 1
      %s212 = smul.addr %s211, 4
      %s213 = scalar_lea.vmem %s5, %s212
      %p214 = scmp.lt.s32.totalorder %s16, 1
      %s215 = scalar_select %p214, %s16, 1
      %s216 = smul.addr %s215, 4
      %s217 = smul.addr %s216, 4
      %s218 = scalar_lea.vmem %s0, %s217
      %p219 = scmp.lt.s32.totalorder %s16, 1
      %s220 = scalar_select %p219, %s16, 1
      %s221 = smul.addr %s220, 4
      %s222 = scalar_lea.vmem %s5, %s221
      %vm224 = vcmask 1042432
      %vm225 = vsmask.f32 2304
      %vm226 = vmand %vm224, %vm225
      %vm227 = vcmask 1046532
      %vm228 = vsmask.f32 6400
      %vm229 = vmand %vm227, %vm228
      %vm230 = vmor %vm229, %vm226
      %v231 = vld [vmem:[#allocation2] sm:$0x77]
      %v232 = vsel %vm230, 0, %v231
      %233 = vst [vmem:[#allocation2] sm:$0x77] %v232
      %v234 = vld [vmem:[#allocation2 + $0x8] sm:$0x77]
      %v235 = vsel %vm230, 0, %v234
      %236 = vst [vmem:[#allocation2 + $0x8] sm:$0x77] %v235
      %v237 = vld [vmem:[%s2] sm:$0x3]
      %v239 = vlaneseq
      %v240 = vshrl.u32 %v239, 7
      %v241 = vsub.s32 0, %v240
      %v242 = vrot.slane %v237, %v241
      %v243 = vlaneseq
      %v244 = vshrl.u32 %v243, 7
      %v245 = vsub.s32 1, %v244
      %v246 = vrot.slane %v237, %v245
      %v249 = vld [vmem:[%s218] sm:$0x3]
      %v250 = vld [vmem:[%s1] sm:$0xff]
      %v251 = vld [vmem:[%s1 + $0x8] sm:$0xff]
      %v252 = vld [vmem:[%s1 + $0x10] sm:$0xff]
      %v253 = vld [vmem:[%s1 + $0x18] sm:$0xff]
      %v254 = vld [vmem:[%s1 + $0x20] sm:$0xff]
      %v255 = vld [vmem:[%s1 + $0x28] sm:$0xff]
      %v256 = vld [vmem:[%s1 + $0x30] sm:$0x77]
      %v264 = vunpack.c.l.b16 %v250
      %v265 = vunpack.c.h.b16 %v250
      %v266 = vunpack.c.l.b16 %v251
      %v267 = vunpack.c.h.b16 %v251
      %v268 = vunpack.c.l.b16 %v252
      %v269 = vunpack.c.h.b16 %v252
      %v270 = vunpack.c.l.b16 %v253
      %v271 = vunpack.c.h.b16 %v253
      %v272 = vunpack.c.l.b16 %v254
      %v273 = vunpack.c.h.b16 %v254
      %v274 = vunpack.c.l.b16 %v255
      %v275 = vunpack.c.h.b16 %v255
      %v276 = vunpack.c.l.b16 %v256
      %v277 = vunpack.c.h.b16 %v256
      %v278 = vpack.c.b16 %v266, %v264
      %v279 = vpack.c.b16 %v267, %v265
      %v280 = vpack.c.b16 %v270, %v268
      %v281 = vpack.c.b16 %v271, %v269
      %v282 = vpack.c.b16 %v274, %v272
      %v283 = vpack.c.b16 %v275, %v273
      %v284 = vpack.c.b16 %v276, %v276
      %v285 = vpack.c.b16 %v277, %v277
      %vm292 = vcmask 441344
      %v294 = vsel %vm292, %v249, 0
      %vm296 = vcmask 1042432
      %v298 = vsel %vm296, %v284, 0
      %v301 = vsel %vm296, %v285, 0
      %303 = vmatprep.subr.bf16.mxu0 %v279
      %304 = vmatpush1.bf16.msra.mxu0 %v278
      %305 = vmatprep.subr.bf16.mxu0 %v281
      %306 = vmatpush1.bf16.msra.mxu0 %v280
      %307 = vmatprep.subr.bf16.mxu0 %v283
      %308 = vmatpush1.bf16.msra.mxu0 %v282
      %309 = vmatprep.subr.bf16.mxu0 %v301
      %310 = vmatpush1.bf16.msra.mxu0 %v298
      %311 = vmatprep.subr.bf16.mxu0 0
      %312 = vmatpush1.bf16.msra.mxu0 0
      %313 = vmatprep.subr.bf16.mxu0 0
      %314 = vmatpush1.bf16.msra.mxu0 0
      %315 = vmatprep.subr.bf16.mxu0 0
      %316 = vmatpush1.bf16.msra.mxu0 0
      %317 = vmatprep.subr.bf16.mxu0 0
      %318 = vmatpush1.bf16.msra.mxu0 0
      %319 = vmatprep.subr.bf16.mxu0 0
      %320 = vmatpush1.bf16.msra.mxu0 0
      %321 = vmatprep.subr.bf16.mxu0 0
      %322 = vmatpush1.bf16.msra.mxu0 0
      %323 = vmatprep.subr.bf16.mxu0 0
      %324 = vmatpush1.bf16.msra.mxu0 0
      %325 = vmatprep.subr.bf16.mxu0 0
      %326 = vmatpush1.bf16.msra.mxu0 0
      %327 = vmatprep.subr.bf16.mxu0 0
      %328 = vmatpush1.bf16.msra.mxu0 0
      %329 = vmatprep.subr.bf16.mxu0 0
      %330 = vmatpush1.bf16.msra.mxu0 0
      %331 = vmatprep.subr.bf16.mxu0 0
      %332 = vmatpush1.bf16.msra.mxu0 0
      %333 = vmatprep.subr.bf16.mxu0 0
      %334 = vmatpush1.bf16.msra.mxu0 0
      %335 = vmatprep.mubr.bf16.mxu0 0
      %336 = vmatmul.mubr.bf16.gmra.mrb[0].mxu0 %v294
      %v337 = vpop.f32.mrb[0].mxu0
      %v338 = vadd.f32 0.0, %v337
      %v339 = vpop.f32.mrb[0].mxu0
      %v340 = vadd.f32 0.0, %v339
      %v341 = vpop.f32.mrb[0].mxu0
      %v342 = vpop.f32.mrb[0].mxu0
      %343 = vdwg.mxu0
      %v344 = vadd.f32 %v242, %v338
      %v345 = vadd.f32 %v246, %v340
      %s346 = scalar_lea.vmem %s218, 4
      %v347 = vld [vmem:[%s346] sm:$0x3]
      %s348 = scalar_lea.vmem %s1, 56
      %v349 = vld [vmem:[%s348] sm:$0xff]
      %v350 = vld [vmem:[%s348 + $0x8] sm:$0xff]
      %v351 = vld [vmem:[%s348 + $0x10] sm:$0xff]
      %v352 = vld [vmem:[%s348 + $0x18] sm:$0xff]
      %v353 = vld [vmem:[%s348 + $0x20] sm:$0xff]
      %v354 = vld [vmem:[%s348 + $0x28] sm:$0xff]
      %v355 = vld [vmem:[%s348 + $0x30] sm:$0x77]
      %v363 = vunpack.c.l.b16 %v349
      %v364 = vunpack.c.h.b16 %v349
      %v365 = vunpack.c.l.b16 %v350
      %v366 = vunpack.c.h.b16 %v350
      %v367 = vunpack.c.l.b16 %v351
      %v368 = vunpack.c.h.b16 %v351
      %v369 = vunpack.c.l.b16 %v352
      %v370 = vunpack.c.h.b16 %v352
      %v371 = vunpack.c.l.b16 %v353
      %v372 = vunpack.c.h.b16 %v353
      %v373 = vunpack.c.l.b16 %v354
      %v374 = vunpack.c.h.b16 %v354
      %v375 = vunpack.c.l.b16 %v355
      %v376 = vunpack.c.h.b16 %v355
      %v377 = vpack.c.b16 %v365, %v363
      %v378 = vpack.c.b16 %v366, %v364
      %v379 = vpack.c.b16 %v369, %v367
      %v380 = vpack.c.b16 %v370, %v368
      %v381 = vpack.c.b16 %v373, %v371
      %v382 = vpack.c.b16 %v374, %v372
      %v383 = vpack.c.b16 %v375, %v375
      %v384 = vpack.c.b16 %v376, %v376
      %v392 = vsel %vm292, %v347, 0
      %v395 = vsel %vm296, %v383, 0
      %v398 = vsel %vm296, %v384, 0
      %400 = vmatprep.subr.bf16.mxu0 %v378
      %401 = vmatpush1.bf16.msra.mxu0 %v377
      %402 = vmatprep.subr.bf16.mxu0 %v380
      %403 = vmatpush1.bf16.msra.mxu0 %v379
      %404 = vmatprep.subr.bf16.mxu0 %v382
      %405 = vmatpush1.bf16.msra.mxu0 %v381
      %406 = vmatprep.subr.bf16.mxu0 %v398
      %407 = vmatpush1.bf16.msra.mxu0 %v395
      %408 = vmatprep.subr.bf16.mxu0 0
      %409 = vmatpush1.bf16.msra.mxu0 0
      %410 = vmatprep.subr.bf16.mxu0 0
      %411 = vmatpush1.bf16.msra.mxu0 0
      %412 = vmatprep.subr.bf16.mxu0 0
      %413 = vmatpush1.bf16.msra.mxu0 0
      %414 = vmatprep.subr.bf16.mxu0 0
      %415 = vmatpush1.bf16.msra.mxu0 0
      %416 = vmatprep.subr.bf16.mxu0 0
      %417 = vmatpush1.bf16.msra.mxu0 0
      %418 = vmatprep.subr.bf16.mxu0 0
      %419 = vmatpush1.bf16.msra.mxu0 0
      %420 = vmatprep.subr.bf16.mxu0 0
      %421 = vmatpush1.bf16.msra.mxu0 0
      %422 = vmatprep.subr.bf16.mxu0 0
      %423 = vmatpush1.bf16.msra.mxu0 0
      %424 = vmatprep.subr.bf16.mxu0 0
      %425 = vmatpush1.bf16.msra.mxu0 0
      %426 = vmatprep.subr.bf16.mxu0 0
      %427 = vmatpush1.bf16.msra.mxu0 0
      %428 = vmatprep.subr.bf16.mxu0 0
      %429 = vmatpush1.bf16.msra.mxu0 0
      %430 = vmatprep.subr.bf16.mxu0 0
      %431 = vmatpush1.bf16.msra.mxu0 0
      %432 = vmatprep.mubr.bf16.mxu0 0
      %433 = vmatmul.mubr.bf16.gmra.mrb[0].mxu0 %v392
      %v434 = vpop.f32.mrb[0].mxu0
      %v435 = vadd.f32 0.0, %v434
      %v436 = vpop.f32.mrb[0].mxu0
      %v437 = vadd.f32 0.0, %v436
      %v438 = vpop.f32.mrb[0].mxu0
      %v439 = vpop.f32.mrb[0].mxu0
      %440 = vdwg.mxu0
      %v441 = vadd.f32 %v344, %v435
      %v442 = vadd.f32 %v345, %v437
      %s443 = scalar_lea.vmem %s218, 8
      %v444 = vld [vmem:[%s443] sm:$0x3]
      %s445 = scalar_lea.vmem %s1, 112
      %v446 = vld [vmem:[%s445] sm:$0xff]
      %v447 = vld [vmem:[%s445 + $0x8] sm:$0xff]
      %v448 = vld [vmem:[%s445 + $0x10] sm:$0xff]
      %v449 = vld [vmem:[%s445 + $0x18] sm:$0xff]
      %v450 = vld [vmem:[%s445 + $0x20] sm:$0xff]
      %v451 = vld [vmem:[%s445 + $0x28] sm:$0xff]
      %v452 = vld [vmem:[%s445 + $0x30] sm:$0x77]
      %v460 = vunpack.c.l.b16 %v446
      %v461 = vunpack.c.h.b16 %v446
      %v462 = vunpack.c.l.b16 %v447
      %v463 = vunpack.c.h.b16 %v447
      %v464 = vunpack.c.l.b16 %v448
      %v465 = vunpack.c.h.b16 %v448
      %v466 = vunpack.c.l.b16 %v449
      %v467 = vunpack.c.h.b16 %v449
      %v468 = vunpack.c.l.b16 %v450
      %v469 = vunpack.c.h.b16 %v450
      %v470 = vunpack.c.l.b16 %v451
      %v471 = vunpack.c.h.b16 %v451
      %v472 = vunpack.c.l.b16 %v452
      %v473 = vunpack.c.h.b16 %v452
      %v474 = vpack.c.b16 %v462, %v460
      %v475 = vpack.c.b16 %v463, %v461
      %v476 = vpack.c.b16 %v466, %v464
      %v477 = vpack.c.b16 %v467, %v465
      %v478 = vpack.c.b16 %v470, %v468
      %v479 = vpack.c.b16 %v471, %v469
      %v480 = vpack.c.b16 %v472, %v472
      %v481 = vpack.c.b16 %v473, %v473
      %v489 = vsel %vm292, %v444, 0
      %v492 = vsel %vm296, %v480, 0
      %v495 = vsel %vm296, %v481, 0
      %497 = vmatprep.subr.bf16.mxu0 %v475
      %498 = vmatpush1.bf16.msra.mxu0 %v474
      %499 = vmatprep.subr.bf16.mxu0 %v477
      %500 = vmatpush1.bf16.msra.mxu0 %v476
      %501 = vmatprep.subr.bf16.mxu0 %v479
      %502 = vmatpush1.bf16.msra.mxu0 %v478
      %503 = vmatprep.subr.bf16.mxu0 %v495
      %504 = vmatpush1.bf16.msra.mxu0 %v492
      %505 = vmatprep.subr.bf16.mxu0 0
      %506 = vmatpush1.bf16.msra.mxu0 0
      %507 = vmatprep.subr.bf16.mxu0 0
      %508 = vmatpush1.bf16.msra.mxu0 0
      %509 = vmatprep.subr.bf16.mxu0 0
      %510 = vmatpush1.bf16.msra.mxu0 0
      %511 = vmatprep.subr.bf16.mxu0 0
      %512 = vmatpush1.bf16.msra.mxu0 0
      %513 = vmatprep.subr.bf16.mxu0 0
      %514 = vmatpush1.bf16.msra.mxu0 0
      %515 = vmatprep.subr.bf16.mxu0 0
      %516 = vmatpush1.bf16.msra.mxu0 0
      %517 = vmatprep.subr.bf16.mxu0 0
      %518 = vmatpush1.bf16.msra.mxu0 0
      %519 = vmatprep.subr.bf16.mxu0 0
      %520 = vmatpush1.bf16.msra.mxu0 0
      %521 = vmatprep.subr.bf16.mxu0 0
      %522 = vmatpush1.bf16.msra.mxu0 0
      %523 = vmatprep.subr.bf16.mxu0 0
      %524 = vmatpush1.bf16.msra.mxu0 0
      %525 = vmatprep.subr.bf16.mxu0 0
      %526 = vmatpush1.bf16.msra.mxu0 0
      %527 = vmatprep.subr.bf16.mxu0 0
      %528 = vmatpush1.bf16.msra.mxu0 0
      %529 = vmatprep.mubr.bf16.mxu0 0
      %530 = vmatmul.mubr.bf16.gmra.mrb[0].mxu0 %v489
      %v531 = vpop.f32.mrb[0].mxu0
      %v532 = vadd.f32 0.0, %v531
      %v533 = vpop.f32.mrb[0].mxu0
      %v534 = vadd.f32 0.0, %v533
      %v535 = vpop.f32.mrb[0].mxu0
      %v536 = vpop.f32.mrb[0].mxu0
      %537 = vdwg.mxu0
      %v538 = vadd.f32 %v441, %v532
      %v539 = vadd.f32 %v442, %v534
      %v540 = vmax.f32 %v538, 0.0
      %v541 = vmax.f32 %v539, 0.0
      %v542 = vpack.c.bf16 %v540, %v540
      %v543 = vpack.c.bf16 %v541, %v541
      %v546 = vunpack.c.l.b16 %v542
      %v547 = vunpack.c.l.b16 %v543
      %v548 = vpack.c.b16 %v547, %v546
      %v550 = vshrl.u32 %v548, 16
      %v552 = vrot.slane %v550, 7
      %v553 = vshll.u32 %v548, 16
      %v555 = vor.u32 %v552, %v553
      %vm557 = vsmask.f32 2306
      %vm558 = vmand %vm224, %vm557
      %vm559 = vsmask.f32 6418
      %vm560 = vmand %vm227, %vm559
      %vm561 = vmor %vm560, %vm558
      %v562 = vld [vmem:[#allocation2] sm:$0x77]
      %v563 = vsel %vm561, %v555, %v562
      %564 = vst [vmem:[#allocation2] sm:$0x77] %v563
      %v565 = vld [vmem:[%s2] sm:$0x3]
      %v567 = vlaneseq
      %v568 = vshrl.u32 %v567, 7
      %v569 = vsub.s32 0, %v568
      %v570 = vrot.slane %v565, %v569
      %v571 = vlaneseq
      %v572 = vshrl.u32 %v571, 7
      %v573 = vsub.s32 1, %v572
      %v574 = vrot.slane %v565, %v573
      %v577 = vld [vmem:[%s443] sm:$0x3]
      %v578 = vld [vmem:[%s1] sm:$0xff]
      %v579 = vld [vmem:[%s1 + $0x8] sm:$0xff]
      %v580 = vld [vmem:[%s1 + $0x10] sm:$0xff]
      %v581 = vld [vmem:[%s1 + $0x18] sm:$0xff]
      %v582 = vld [vmem:[%s1 + $0x20] sm:$0xff]
      %v583 = vld [vmem:[%s1 + $0x28] sm:$0xff]
      %v584 = vld [vmem:[%s1 + $0x30] sm:$0x77]
      %v592 = vunpack.c.l.b16 %v578
      %v593 = vunpack.c.h.b16 %v578
      %v594 = vunpack.c.l.b16 %v579
      %v595 = vunpack.c.h.b16 %v579
      %v596 = vunpack.c.l.b16 %v580
      %v597 = vunpack.c.h.b16 %v580
      %v598 = vunpack.c.l.b16 %v581
      %v599 = vunpack.c.h.b16 %v581
      %v600 = vunpack.c.l.b16 %v582
      %v601 = vunpack.c.h.b16 %v582
      %v602 = vunpack.c.l.b16 %v583
      %v603 = vunpack.c.h.b16 %v583
      %v604 = vunpack.c.l.b16 %v584
      %v605 = vunpack.c.h.b16 %v584
      %v606 = vpack.c.b16 %v594, %v592
      %v607 = vpack.c.b16 %v595, %v593
      %v608 = vpack.c.b16 %v598, %v596
      %v609 = vpack.c.b16 %v599, %v597
      %v610 = vpack.c.b16 %v602, %v600
      %v611 = vpack.c.b16 %v603, %v601
      %v612 = vpack.c.b16 %v604, %v604
      %v613 = vpack.c.b16 %v605, %v605
      %v621 = vsel %vm292, %v577, 0
      %v624 = vsel %vm296, %v612, 0
      %v627 = vsel %vm296, %v613, 0
      %629 = vmatprep.subr.bf16.mxu0 %v607
      %630 = vmatpush1.bf16.msra.mxu0 %v606
      %631 = vmatprep.subr.bf16.mxu0 %v609
      %632 = vmatpush1.bf16.msra.mxu0 %v608
      %633 = vmatprep.subr.bf16.mxu0 %v611
      %634 = vmatpush1.bf16.msra.mxu0 %v610
      %635 = vmatprep.subr.bf16.mxu0 %v627
      %636 = vmatpush1.bf16.msra.mxu0 %v624
      %637 = vmatprep.subr.bf16.mxu0 0
      %638 = vmatpush1.bf16.msra.mxu0 0
      %639 = vmatprep.subr.bf16.mxu0 0
      %640 = vmatpush1.bf16.msra.mxu0 0
      %641 = vmatprep.subr.bf16.mxu0 0
      %642 = vmatpush1.bf16.msra.mxu0 0
      %643 = vmatprep.subr.bf16.mxu0 0
      %644 = vmatpush1.bf16.msra.mxu0 0
      %645 = vmatprep.subr.bf16.mxu0 0
      %646 = vmatpush1.bf16.msra.mxu0 0
      %647 = vmatprep.subr.bf16.mxu0 0
      %648 = vmatpush1.bf16.msra.mxu0 0
      %649 = vmatprep.subr.bf16.mxu0 0
      %650 = vmatpush1.bf16.msra.mxu0 0
      %651 = vmatprep.subr.bf16.mxu0 0
      %652 = vmatpush1.bf16.msra.mxu0 0
      %653 = vmatprep.subr.bf16.mxu0 0
      %654 = vmatpush1.bf16.msra.mxu0 0
      %655 = vmatprep.subr.bf16.mxu0 0
      %656 = vmatpush1.bf16.msra.mxu0 0
      %657 = vmatprep.subr.bf16.mxu0 0
      %658 = vmatpush1.bf16.msra.mxu0 0
      %659 = vmatprep.subr.bf16.mxu0 0
      %660 = vmatpush1.bf16.msra.mxu0 0
      %661 = vmatprep.mubr.bf16.mxu0 0
      %662 = vmatmul.mubr.bf16.gmra.mrb[0].mxu0 %v621
      %v663 = vpop.f32.mrb[0].mxu0
      %v664 = vadd.f32 0.0, %v663
      %v665 = vpop.f32.mrb[0].mxu0
      %v666 = vadd.f32 0.0, %v665
      %v667 = vpop.f32.mrb[0].mxu0
      %v668 = vpop.f32.mrb[0].mxu0
      %669 = vdwg.mxu0
      %v670 = vadd.f32 %v570, %v664
      %v671 = vadd.f32 %v574, %v666
      %s672 = scalar_lea.vmem %s218, 12
      %v673 = vld [vmem:[%s672] sm:$0x3]
      %v674 = vld [vmem:[%s348] sm:$0xff]
      %v675 = vld [vmem:[%s348 + $0x8] sm:$0xff]
      %v676 = vld [vmem:[%s348 + $0x10] sm:$0xff]
      %v677 = vld [vmem:[%s348 + $0x18] sm:$0xff]
      %v678 = vld [vmem:[%s348 + $0x20] sm:$0xff]
      %v679 = vld [vmem:[%s348 + $0x28] sm:$0xff]
      %v680 = vld [vmem:[%s348 + $0x30] sm:$0x77]
      %v688 = vunpack.c.l.b16 %v674
      %v689 = vunpack.c.h.b16 %v674
      %v690 = vunpack.c.l.b16 %v675
      %v691 = vunpack.c.h.b16 %v675
      %v692 = vunpack.c.l.b16 %v676
      %v693 = vunpack.c.h.b16 %v676
      %v694 = vunpack.c.l.b16 %v677
      %v695 = vunpack.c.h.b16 %v677
      %v696 = vunpack.c.l.b16 %v678
      %v697 = vunpack.c.h.b16 %v678
      %v698 = vunpack.c.l.b16 %v679
      %v699 = vunpack.c.h.b16 %v679
      %v700 = vunpack.c.l.b16 %v680
      %v701 = vunpack.c.h.b16 %v680
      %v702 = vpack.c.b16 %v690, %v688
      %v703 = vpack.c.b16 %v691, %v689
      %v704 = vpack.c.b16 %v694, %v692
      %v705 = vpack.c.b16 %v695, %v693
      %v706 = vpack.c.b16 %v698, %v696
      %v707 = vpack.c.b16 %v699, %v697
      %v708 = vpack.c.b16 %v700, %v700
      %v709 = vpack.c.b16 %v701, %v701
      %v717 = vsel %vm292, %v673, 0
      %v720 = vsel %vm296, %v708, 0
      %v723 = vsel %vm296, %v709, 0
      %725 = vmatprep.subr.bf16.mxu0 %v703
      %726 = vmatpush1.bf16.msra.mxu0 %v702
      %727 = vmatprep.subr.bf16.mxu0 %v705
      %728 = vmatpush1.bf16.msra.mxu0 %v704
      %729 = vmatprep.subr.bf16.mxu0 %v707
      %730 = vmatpush1.bf16.msra.mxu0 %v706
      %731 = vmatprep.subr.bf16.mxu0 %v723
      %732 = vmatpush1.bf16.msra.mxu0 %v720
      %733 = vmatprep.subr.bf16.mxu0 0
      %734 = vmatpush1.bf16.msra.mxu0 0
      %735 = vmatprep.subr.bf16.mxu0 0
      %736 = vmatpush1.bf16.msra.mxu0 0
      %737 = vmatprep.subr.bf16.mxu0 0
      %738 = vmatpush1.bf16.msra.mxu0 0
      %739 = vmatprep.subr.bf16.mxu0 0
      %740 = vmatpush1.bf16.msra.mxu0 0
      %741 = vmatprep.subr.bf16.mxu0 0
      %742 = vmatpush1.bf16.msra.mxu0 0
      %743 = vmatprep.subr.bf16.mxu0 0
      %744 = vmatpush1.bf16.msra.mxu0 0
      %745 = vmatprep.subr.bf16.mxu0 0
      %746 = vmatpush1.bf16.msra.mxu0 0
      %747 = vmatprep.subr.bf16.mxu0 0
      %748 = vmatpush1.bf16.msra.mxu0 0
      %749 = vmatprep.subr.bf16.mxu0 0
      %750 = vmatpush1.bf16.msra.mxu0 0
      %751 = vmatprep.subr.bf16.mxu0 0
      %752 = vmatpush1.bf16.msra.mxu0 0
      %753 = vmatprep.subr.bf16.mxu0 0
      %754 = vmatpush1.bf16.msra.mxu0 0
      %755 = vmatprep.subr.bf16.mxu0 0
      %756 = vmatpush1.bf16.msra.mxu0 0
      %757 = vmatprep.mubr.bf16.mxu0 0
      %758 = vmatmul.mubr.bf16.gmra.mrb[0].mxu0 %v717
      %v759 = vpop.f32.mrb[0].mxu0
      %v760 = vadd.f32 0.0, %v759
      %v761 = vpop.f32.mrb[0].mxu0
      %v762 = vadd.f32 0.0, %v761
      %v763 = vpop.f32.mrb[0].mxu0
      %v764 = vpop.f32.mrb[0].mxu0
      %765 = vdwg.mxu0
      %v766 = vadd.f32 %v670, %v760
      %v767 = vadd.f32 %v671, %v762
      %v768 = vld [vmem:[%s218] sm:$0x7]
      %v769 = vld [vmem:[%s445] sm:$0xff]
      %v770 = vld [vmem:[%s445 + $0x8] sm:$0xff]
      %v771 = vld [vmem:[%s445 + $0x10] sm:$0xff]
      %v772 = vld [vmem:[%s445 + $0x18] sm:$0xff]
      %v773 = vld [vmem:[%s445 + $0x20] sm:$0xff]
      %v774 = vld [vmem:[%s445 + $0x28] sm:$0xff]
      %v775 = vld [vmem:[%s445 + $0x30] sm:$0x77]
      %v777 = vunpack.c.l.b16 %v768
      %v778 = vpack.c.b16 %v777, %v777
      %v780 = vshrl.u32 %v778, 16
      %v782 = vshll.u32 %v778, 16
      %v784 = vrot.slane %v782, 1
      %v785 = vor.u32 %v780, %v784
      %v793 = vunpack.c.l.b16 %v769
      %v794 = vunpack.c.h.b16 %v769
      %v795 = vunpack.c.l.b16 %v770
      %v796 = vunpack.c.h.b16 %v770
      %v797 = vunpack.c.l.b16 %v771
      %v798 = vunpack.c.h.b16 %v771
      %v799 = vunpack.c.l.b16 %v772
      %v800 = vunpack.c.h.b16 %v772
      %v801 = vunpack.c.l.b16 %v773
      %v802 = vunpack.c.h.b16 %v773
      %v803 = vunpack.c.l.b16 %v774
      %v804 = vunpack.c.h.b16 %v774
      %v805 = vunpack.c.l.b16 %v775
      %v806 = vunpack.c.h.b16 %v775
      %v807 = vpack.c.b16 %v795, %v793
      %v808 = vpack.c.b16 %v796, %v794
      %v809 = vpack.c.b16 %v799, %v797
      %v810 = vpack.c.b16 %v800, %v798
      %v811 = vpack.c.b16 %v803, %v801
      %v812 = vpack.c.b16 %v804, %v802
      %v813 = vpack.c.b16 %v805, %v805
      %v814 = vpack.c.b16 %v806, %v806
      %v822 = vsel %vm292, %v785, 0
      %v825 = vsel %vm296, %v813, 0
      %v828 = vsel %vm296, %v814, 0
      %830 = vmatprep.subr.bf16.mxu0 %v808
      %831 = vmatpush1.bf16.msra.mxu0 %v807
      %832 = vmatprep.subr.bf16.mxu0 %v810
      %833 = vmatpush1.bf16.msra.mxu0 %v809
      %834 = vmatprep.subr.bf16.mxu0 %v812
      %835 = vmatpush1.bf16.msra.mxu0 %v811
      %836 = vmatprep.subr.bf16.mxu0 %v828
      %837 = vmatpush1.bf16.msra.mxu0 %v825
      %838 = vmatprep.subr.bf16.mxu0 0
      %839 = vmatpush1.bf16.msra.mxu0 0
      %840 = vmatprep.subr.bf16.mxu0 0
      %841 = vmatpush1.bf16.msra.mxu0 0
      %842 = vmatprep.subr.bf16.mxu0 0
      %843 = vmatpush1.bf16.msra.mxu0 0
      %844 = vmatprep.subr.bf16.mxu0 0
      %845 = vmatpush1.bf16.msra.mxu0 0
      %846 = vmatprep.subr.bf16.mxu0 0
      %847 = vmatpush1.bf16.msra.mxu0 0
      %848 = vmatprep.subr.bf16.mxu0 0
      %849 = vmatpush1.bf16.msra.mxu0 0
      %850 = vmatprep.subr.bf16.mxu0 0
      %851 = vmatpush1.bf16.msra.mxu0 0
      %852 = vmatprep.subr.bf16.mxu0 0
      %853 = vmatpush1.bf16.msra.mxu0 0
      %854 = vmatprep.subr.bf16.mxu0 0
      %855 = vmatpush1.bf16.msra.mxu0 0
      %856 = vmatprep.subr.bf16.mxu0 0
      %857 = vmatpush1.bf16.msra.mxu0 0
      %858 = vmatprep.subr.bf16.mxu0 0
      %859 = vmatpush1.bf16.msra.mxu0 0
      %860 = vmatprep.subr.bf16.mxu0 0
      %861 = vmatpush1.bf16.msra.mxu0 0
      %862 = vmatprep.mubr.bf16.mxu0 0
      %863 = vmatmul.mubr.bf16.gmra.mrb[0].mxu0 %v822
      %v864 = vpop.f32.mrb[0].mxu0
      %v865 = vadd.f32 0.0, %v864
      %v866 = vpop.f32.mrb[0].mxu0
      %v867 = vadd.f32 0.0, %v866
      %v868 = vpop.f32.mrb[0].mxu0
      %v869 = vpop.f32.mrb[0].mxu0
      %870 = vdwg.mxu0
      %v871 = vadd.f32 %v766, %v865
      %v872 = vadd.f32 %v767, %v867
      %v873 = vmax.f32 %v871, 0.0
      %v874 = vmax.f32 %v872, 0.0
      %v875 = vpack.c.bf16 %v873, %v873
      %v876 = vpack.c.bf16 %v874, %v874
      %v879 = vunpack.c.l.b16 %v875
      %v880 = vunpack.c.l.b16 %v876
      %v881 = vpack.c.b16 %v880, %v879
      %v883 = vshrl.u32 %v881, 16
      %v885 = vrot.slane %v883, 7
      %v886 = vshll.u32 %v881, 16
      %v888 = vor.u32 %v885, %v886
      %s890 = scalar_lea.vmem [#allocation2], 8
      %v891 = vld [vmem:[%s890] sm:$0x77]
      %v892 = vsel %vm561, %v888, %v891
      %893 = vst [vmem:[%s890] sm:$0x77] %v892
      %v894 = vld [vmem:[%s4] sm:$0x1]
      %v896 = vlaneseq
      %v897 = vshrl.u32 %v896, 7
      %v898 = vsub.s32 0, %v897
      %v899 = vrot.slane %v894, %v898
      %v901 = vld [vmem:[%s890] sm:$0x33]
      %v902 = vld [vmem:[%s3] sm:$0xf]
      %v903 = vld [vmem:[%s3 + $0x4] sm:$0xf]
      %v904 = vld [vmem:[%s3 + $0x8] sm:$0xf]
      %v905 = vld [vmem:[%s3 + $0xc] sm:$0xf]
      %v906 = vld [vmem:[%s3 + $0x10] sm:$0xf]
      %v907 = vld [vmem:[%s3 + $0x14] sm:$0xf]
      %v908 = vld [vmem:[%s3 + $0x18] sm:$0xf]
      %v909 = vld [vmem:[%s3 + $0x1c] sm:$0xf]
      %v910 = vld [vmem:[%s3 + $0x20] sm:$0xf]
      %v911 = vld [vmem:[%s3 + $0x24] sm:$0xf]
      %v912 = vld [vmem:[%s3 + $0x28] sm:$0xf]
      %v913 = vld [vmem:[%s3 + $0x2c] sm:$0xf]
      %v914 = vld [vmem:[%s3 + $0x30] sm:$0xf]
      %v915 = vld [vmem:[%s3 + $0x34] sm:$0xf]
      %v916 = vld [vmem:[%s3 + $0x38] sm:$0xf]
      %v917 = vld [vmem:[%s3 + $0x3c] sm:$0xf]
      %v918 = vld [vmem:[%s3 + $0x40] sm:$0xf]
      %v919 = vld [vmem:[%s3 + $0x44] sm:$0xf]
      %v920 = vld [vmem:[%s3 + $0x48] sm:$0xf]
      %v921 = vld [vmem:[%s3 + $0x4c] sm:$0xf]
      %v922 = vld [vmem:[%s3 + $0x50] sm:$0xf]
      %v923 = vld [vmem:[%s3 + $0x54] sm:$0xf]
      %v924 = vld [vmem:[%s3 + $0x58] sm:$0xf]
      %v925 = vld [vmem:[%s3 + $0x5c] sm:$0xf]
      %v926 = vld [vmem:[%s3 + $0x60] sm:$0xf]
      %v927 = vld [vmem:[%s3 + $0x64] sm:$0xf]
      %v928 = vld [vmem:[%s3 + $0x68] sm:$0xf]
      %v929 = vld [vmem:[%s3 + $0x6c] sm:$0xf]
      %v930 = vld [vmem:[%s3 + $0x70] sm:$0xf]
      %v931 = vld [vmem:[%s3 + $0x74] sm:$0xf]
      %v932 = vld [vmem:[%s3 + $0x78] sm:$0xf]
      %v933 = vld [vmem:[%s3 + $0x7c] sm:$0xf]
      %v935 = vunpack.c.l.b16 %v901
      %v936 = vunpack.c.h.b16 %v901
      %v937 = vpack.c.b16 %v935, %v935
      %v938 = vpack.c.b16 %v936, %v936
      %v973 = vunpack.c.l.b16 %v902
      %v974 = vunpack.c.l.b16 %v903
      %v975 = vunpack.c.l.b16 %v904
      %v976 = vunpack.c.l.b16 %v905
      %v977 = vunpack.c.l.b16 %v906
      %v978 = vunpack.c.l.b16 %v907
      %v979 = vunpack.c.l.b16 %v908
      %v980 = vunpack.c.l.b16 %v909
      %v981 = vunpack.c.l.b16 %v910
      %v982 = vunpack.c.l.b16 %v911
      %v983 = vunpack.c.l.b16 %v912
      %v984 = vunpack.c.l.b16 %v913
      %v985 = vunpack.c.l.b16 %v914
      %v986 = vunpack.c.l.b16 %v915
      %v987 = vunpack.c.l.b16 %v916
      %v988 = vunpack.c.l.b16 %v917
      %v989 = vunpack.c.l.b16 %v918
      %v990 = vunpack.c.l.b16 %v919
      %v991 = vunpack.c.l.b16 %v920
      %v992 = vunpack.c.l.b16 %v921
      %v993 = vunpack.c.l.b16 %v922
      %v994 = vunpack.c.l.b16 %v923
      %v995 = vunpack.c.l.b16 %v924
      %v996 = vunpack.c.l.b16 %v925
      %v997 = vunpack.c.l.b16 %v926
      %v998 = vunpack.c.l.b16 %v927
      %v999 = vunpack.c.l.b16 %v928
      %v1000 = vunpack.c.l.b16 %v929
      %v1001 = vunpack.c.l.b16 %v930
      %v1002 = vunpack.c.l.b16 %v931
      %v1003 = vunpack.c.l.b16 %v932
      %v1004 = vunpack.c.l.b16 %v933
      %v1005 = vpack.c.b16 %v974, %v973
      %v1006 = vpack.c.b16 %v976, %v975
      %v1007 = vpack.c.b16 %v978, %v977
      %v1008 = vpack.c.b16 %v980, %v979
      %v1009 = vpack.c.b16 %v982, %v981
      %v1010 = vpack.c.b16 %v984, %v983
      %v1011 = vpack.c.b16 %v986, %v985
      %v1012 = vpack.c.b16 %v988, %v987
      %v1013 = vpack.c.b16 %v990, %v989
      %v1014 = vpack.c.b16 %v992, %v991
      %v1015 = vpack.c.b16 %v994, %v993
      %v1016 = vpack.c.b16 %v996, %v995
      %v1017 = vpack.c.b16 %v998, %v997
      %v1018 = vpack.c.b16 %v1000, %v999
      %v1019 = vpack.c.b16 %v1002, %v1001
      %v1020 = vpack.c.b16 %v1004, %v1003
      %1037 = vmatprep.subr.bf16.mxu0 0
      %1038 = vmatpush1.bf16.msra.mxu0 %v1005
      %1039 = vmatprep.subr.bf16.mxu0 0
      %1040 = vmatpush1.bf16.msra.mxu0 %v1006
      %1041 = vmatprep.subr.bf16.mxu0 0
      %1042 = vmatpush1.bf16.msra.mxu0 %v1007
      %1043 = vmatprep.subr.bf16.mxu0 0
      %1044 = vmatpush1.bf16.msra.mxu0 %v1008
      %1045 = vmatprep.subr.bf16.mxu0 0
      %1046 = vmatpush1.bf16.msra.mxu0 %v1009
      %1047 = vmatprep.subr.bf16.mxu0 0
      %1048 = vmatpush1.bf16.msra.mxu0 %v1010
      %1049 = vmatprep.subr.bf16.mxu0 0
      %1050 = vmatpush1.bf16.msra.mxu0 %v1011
      %1051 = vmatprep.subr.bf16.mxu0 0
      %1052 = vmatpush1.bf16.msra.mxu0 %v1012
      %1053 = vmatprep.subr.bf16.mxu0 0
      %1054 = vmatpush1.bf16.msra.mxu0 %v1013
      %1055 = vmatprep.subr.bf16.mxu0 0
      %1056 = vmatpush1.bf16.msra.mxu0 %v1014
      %1057 = vmatprep.subr.bf16.mxu0 0
      %1058 = vmatpush1.bf16.msra.mxu0 %v1015
      %1059 = vmatprep.subr.bf16.mxu0 0
      %1060 = vmatpush1.bf16.msra.mxu0 %v1016
      %1061 = vmatprep.subr.bf16.mxu0 0
      %1062 = vmatpush1.bf16.msra.mxu0 %v1017
      %1063 = vmatprep.subr.bf16.mxu0 0
      %1064 = vmatpush1.bf16.msra.mxu0 %v1018
      %1065 = vmatprep.subr.bf16.mxu0 0
      %1066 = vmatpush1.bf16.msra.mxu0 %v1019
      %1067 = vmatprep.subr.bf16.mxu0 0
      %1068 = vmatpush1.bf16.msra.mxu0 %v1020
      %1069 = vmatprep.mubr.bf16.mxu0 %v938
      %1070 = vmatmul.mubr.bf16.gmra.mrb[0].mxu0 %v937
      %v1071 = vpop.f32.mrb[0].mxu0
      %v1072 = vadd.f32 0.0, %v1071
      %v1073 = vpop.f32.mrb[0].mxu0
      %v1074 = vpop.f32.mrb[0].mxu0
      %v1075 = vpop.f32.mrb[0].mxu0
      %1076 = vdwg.mxu0
      %v1077 = vadd.f32 %v899, %v1072
      %v1078 = vld [vmem:[#allocation2] sm:$0x77]
      %s1079 = scalar_lea.vmem %s3, 128
      %v1080 = vld [vmem:[%s1079] sm:$0xf]
      %v1081 = vld [vmem:[%s1079 + $0x4] sm:$0xf]
      %v1082 = vld [vmem:[%s1079 + $0x8] sm:$0xf]
      %v1083 = vld [vmem:[%s1079 + $0xc] sm:$0xf]
      %v1084 = vld [vmem:[%s1079 + $0x10] sm:$0xf]
      %v1085 = vld [vmem:[%s1079 + $0x14] sm:$0xf]
      %v1086 = vld [vmem:[%s1079 + $0x18] sm:$0xf]
      %v1087 = vld [vmem:[%s1079 + $0x1c] sm:$0xf]
      %v1088 = vld [vmem:[%s1079 + $0x20] sm:$0xf]
      %v1089 = vld [vmem:[%s1079 + $0x24] sm:$0xf]
      %v1090 = vld [vmem:[%s1079 + $0x28] sm:$0xf]
      %v1091 = vld [vmem:[%s1079 + $0x2c] sm:$0xf]
      %v1092 = vld [vmem:[%s1079 + $0x30] sm:$0xf]
      %v1093 = vld [vmem:[%s1079 + $0x34] sm:$0xf]
      %v1094 = vld [vmem:[%s1079 + $0x38] sm:$0xf]
      %v1095 = vld [vmem:[%s1079 + $0x3c] sm:$0xf]
      %v1096 = vld [vmem:[%s1079 + $0x40] sm:$0xf]
      %v1097 = vld [vmem:[%s1079 + $0x44] sm:$0xf]
      %v1098 = vld [vmem:[%s1079 + $0x48] sm:$0xf]
      %v1099 = vld [vmem:[%s1079 + $0x4c] sm:$0xf]
      %v1100 = vld [vmem:[%s1079 + $0x50] sm:$0xf]
      %v1101 = vld [vmem:[%s1079 + $0x54] sm:$0xf]
      %v1102 = vld [vmem:[%s1079 + $0x58] sm:$0xf]
      %v1103 = vld [vmem:[%s1079 + $0x5c] sm:$0xf]
      %v1104 = vld [vmem:[%s1079 + $0x60] sm:$0xf]
      %v1105 = vld [vmem:[%s1079 + $0x64] sm:$0xf]
      %v1106 = vld [vmem:[%s1079 + $0x68] sm:$0xf]
      %v1107 = vld [vmem:[%s1079 + $0x6c] sm:$0xf]
      %v1108 = vld [vmem:[%s1079 + $0x70] sm:$0xf]
      %v1109 = vld [vmem:[%s1079 + $0x74] sm:$0xf]
      %v1110 = vld [vmem:[%s1079 + $0x78] sm:$0xf]
      %v1111 = vld [vmem:[%s1079 + $0x7c] sm:$0xf]
      %v1113 = vunpack.c.l.b16 %v1078
      %v1114 = vunpack.c.h.b16 %v1078
      %v1115 = vpack.c.b16 %v1113, %v1113
      %v1116 = vpack.c.b16 %v1114, %v1114
      %v1118 = vshrl.u32 %v1115, 16
      %v1120 = vshll.u32 %v1115, 16
      %v1122 = vrot.slane %v1120, 1
      %v1123 = vor.u32 %v1118, %v1122
      %v1125 = vshrl.u32 %v1116, 16
      %v1127 = vshll.u32 %v1116, 16
      %v1129 = vrot.slane %v1127, 1
      %v1130 = vor.u32 %v1125, %v1129
      %v1165 = vunpack.c.l.b16 %v1080
      %v1166 = vunpack.c.l.b16 %v1081
      %v1167 = vunpack.c.l.b16 %v1082
      %v1168 = vunpack.c.l.b16 %v1083
      %v1169 = vunpack.c.l.b16 %v1084
      %v1170 = vunpack.c.l.b16 %v1085
      %v1171 = vunpack.c.l.b16 %v1086
      %v1172 = vunpack.c.l.b16 %v1087
      %v1173 = vunpack.c.l.b16 %v1088
      %v1174 = vunpack.c.l.b16 %v1089
      %v1175 = vunpack.c.l.b16 %v1090
      %v1176 = vunpack.c.l.b16 %v1091
      %v1177 = vunpack.c.l.b16 %v1092
      %v1178 = vunpack.c.l.b16 %v1093
      %v1179 = vunpack.c.l.b16 %v1094
      %v1180 = vunpack.c.l.b16 %v1095
      %v1181 = vunpack.c.l.b16 %v1096
      %v1182 = vunpack.c.l.b16 %v1097
      %v1183 = vunpack.c.l.b16 %v1098
      %v1184 = vunpack.c.l.b16 %v1099
      %v1185 = vunpack.c.l.b16 %v1100
      %v1186 = vunpack.c.l.b16 %v1101
      %v1187 = vunpack.c.l.b16 %v1102
      %v1188 = vunpack.c.l.b16 %v1103
      %v1189 = vunpack.c.l.b16 %v1104
      %v1190 = vunpack.c.l.b16 %v1105
      %v1191 = vunpack.c.l.b16 %v1106
      %v1192 = vunpack.c.l.b16 %v1107
      %v1193 = vunpack.c.l.b16 %v1108
      %v1194 = vunpack.c.l.b16 %v1109
      %v1195 = vunpack.c.l.b16 %v1110
      %v1196 = vunpack.c.l.b16 %v1111
      %v1197 = vpack.c.b16 %v1166, %v1165
      %v1198 = vpack.c.b16 %v1168, %v1167
      %v1199 = vpack.c.b16 %v1170, %v1169
      %v1200 = vpack.c.b16 %v1172, %v1171
      %v1201 = vpack.c.b16 %v1174, %v1173
      %v1202 = vpack.c.b16 %v1176, %v1175
      %v1203 = vpack.c.b16 %v1178, %v1177
      %v1204 = vpack.c.b16 %v1180, %v1179
      %v1205 = vpack.c.b16 %v1182, %v1181
      %v1206 = vpack.c.b16 %v1184, %v1183
      %v1207 = vpack.c.b16 %v1186, %v1185
      %v1208 = vpack.c.b16 %v1188, %v1187
      %v1209 = vpack.c.b16 %v1190, %v1189
      %v1210 = vpack.c.b16 %v1192, %v1191
      %v1211 = vpack.c.b16 %v1194, %v1193
      %v1212 = vpack.c.b16 %v1196, %v1195
      %1229 = vmatprep.subr.bf16.mxu0 0
      %1230 = vmatpush1.bf16.msra.mxu0 %v1197
      %1231 = vmatprep.subr.bf16.mxu0 0
      %1232 = vmatpush1.bf16.msra.mxu0 %v1198
      %1233 = vmatprep.subr.bf16.mxu0 0
      %1234 = vmatpush1.bf16.msra.mxu0 %v1199
      %1235 = vmatprep.subr.bf16.mxu0 0
      %1236 = vmatpush1.bf16.msra.mxu0 %v1200
      %1237 = vmatprep.subr.bf16.mxu0 0
      %1238 = vmatpush1.bf16.msra.mxu0 %v1201
      %1239 = vmatprep.subr.bf16.mxu0 0
      %1240 = vmatpush1.bf16.msra.mxu0 %v1202
      %1241 = vmatprep.subr.bf16.mxu0 0
      %1242 = vmatpush1.bf16.msra.mxu0 %v1203
      %1243 = vmatprep.subr.bf16.mxu0 0
      %1244 = vmatpush1.bf16.msra.mxu0 %v1204
      %1245 = vmatprep.subr.bf16.mxu0 0
      %1246 = vmatpush1.bf16.msra.mxu0 %v1205
      %1247 = vmatprep.subr.bf16.mxu0 0
      %1248 = vmatpush1.bf16.msra.mxu0 %v1206
      %1249 = vmatprep.subr.bf16.mxu0 0
      %1250 = vmatpush1.bf16.msra.mxu0 %v1207
      %1251 = vmatprep.subr.bf16.mxu0 0
      %1252 = vmatpush1.bf16.msra.mxu0 %v1208
      %1253 = vmatprep.subr.bf16.mxu0 0
      %1254 = vmatpush1.bf16.msra.mxu0 %v1209
      %1255 = vmatprep.subr.bf16.mxu0 0
      %1256 = vmatpush1.bf16.msra.mxu0 %v1210
      %1257 = vmatprep.subr.bf16.mxu0 0
      %1258 = vmatpush1.bf16.msra.mxu0 %v1211
      %1259 = vmatprep.subr.bf16.mxu0 0
      %1260 = vmatpush1.bf16.msra.mxu0 %v1212
      %1261 = vmatprep.mubr.bf16.mxu0 %v1130
      %1262 = vmatmul.mubr.bf16.gmra.mrb[0].mxu0 %v1123
      %v1263 = vpop.f32.mrb[0].mxu0
      %v1264 = vadd.f32 0.0, %v1263
      %v1265 = vpop.f32.mrb[0].mxu0
      %v1266 = vpop.f32.mrb[0].mxu0
      %v1267 = vpop.f32.mrb[0].mxu0
      %1268 = vdwg.mxu0
      %v1269 = vadd.f32 %v1077, %v1264
      %v1270 = vld [vmem:[%s890] sm:$0x77]
      %s1271 = scalar_lea.vmem %s3, 256
      %v1272 = vld [vmem:[%s1271] sm:$0xf]
      %v1273 = vld [vmem:[%s1271 + $0x4] sm:$0xf]
      %v1274 = vld [vmem:[%s1271 + $0x8] sm:$0xf]
      %v1275 = vld [vmem:[%s1271 + $0xc] sm:$0xf]
      %v1276 = vld [vmem:[%s1271 + $0x10] sm:$0xf]
      %v1277 = vld [vmem:[%s1271 + $0x14] sm:$0xf]
      %v1278 = vld [vmem:[%s1271 + $0x18] sm:$0xf]
      %v1279 = vld [vmem:[%s1271 + $0x1c] sm:$0xf]
      %v1280 = vld [vmem:[%s1271 + $0x20] sm:$0xf]
      %v1281 = vld [vmem:[%s1271 + $0x24] sm:$0xf]
      %v1282 = vld [vmem:[%s1271 + $0x28] sm:$0xf]
      %v1283 = vld [vmem:[%s1271 + $0x2c] sm:$0xf]
      %v1284 = vld [vmem:[%s1271 + $0x30] sm:$0xf]
      %v1285 = vld [vmem:[%s1271 + $0x34] sm:$0xf]
      %v1286 = vld [vmem:[%s1271 + $0x38] sm:$0xf]
      %v1287 = vld [vmem:[%s1271 + $0x3c] sm:$0xf]
      %v1288 = vld [vmem:[%s1271 + $0x40] sm:$0xf]
      %v1289 = vld [vmem:[%s1271 + $0x44] sm:$0xf]
      %v1290 = vld [vmem:[%s1271 + $0x48] sm:$0xf]
      %v1291 = vld [vmem:[%s1271 + $0x4c] sm:$0xf]
      %v1292 = vld [vmem:[%s1271 + $0x50] sm:$0xf]
      %v1293 = vld [vmem:[%s1271 + $0x54] sm:$0xf]
      %v1294 = vld [vmem:[%s1271 + $0x58] sm:$0xf]
      %v1295 = vld [vmem:[%s1271 + $0x5c] sm:$0xf]
      %v1296 = vld [vmem:[%s1271 + $0x60] sm:$0xf]
      %v1297 = vld [vmem:[%s1271 + $0x64] sm:$0xf]
      %v1298 = vld [vmem:[%s1271 + $0x68] sm:$0xf]
      %v1299 = vld [vmem:[%s1271 + $0x6c] sm:$0xf]
      %v1300 = vld [vmem:[%s1271 + $0x70] sm:$0xf]
      %v1301 = vld [vmem:[%s1271 + $0x74] sm:$0xf]
      %v1302 = vld [vmem:[%s1271 + $0x78] sm:$0xf]
      %v1303 = vld [vmem:[%s1271 + $0x7c] sm:$0xf]
      %v1305 = vunpack.c.l.b16 %v1270
      %v1306 = vunpack.c.h.b16 %v1270
      %v1307 = vpack.c.b16 %v1305, %v1305
      %v1308 = vpack.c.b16 %v1306, %v1306
      %v1310 = vshrl.u32 %v1307, 16
      %v1312 = vshll.u32 %v1307, 16
      %v1314 = vrot.slane %v1312, 1
      %v1315 = vor.u32 %v1310, %v1314
      %v1317 = vshrl.u32 %v1308, 16
      %v1319 = vshll.u32 %v1308, 16
      %v1321 = vrot.slane %v1319, 1
      %v1322 = vor.u32 %v1317, %v1321
      %v1357 = vunpack.c.l.b16 %v1272
      %v1358 = vunpack.c.l.b16 %v1273
      %v1359 = vunpack.c.l.b16 %v1274
      %v1360 = vunpack.c.l.b16 %v1275
      %v1361 = vunpack.c.l.b16 %v1276
      %v1362 = vunpack.c.l.b16 %v1277
      %v1363 = vunpack.c.l.b16 %v1278
      %v1364 = vunpack.c.l.b16 %v1279
      %v1365 = vunpack.c.l.b16 %v1280
      %v1366 = vunpack.c.l.b16 %v1281
      %v1367 = vunpack.c.l.b16 %v1282
      %v1368 = vunpack.c.l.b16 %v1283
      %v1369 = vunpack.c.l.b16 %v1284
      %v1370 = vunpack.c.l.b16 %v1285
      %v1371 = vunpack.c.l.b16 %v1286
      %v1372 = vunpack.c.l.b16 %v1287
      %v1373 = vunpack.c.l.b16 %v1288
      %v1374 = vunpack.c.l.b16 %v1289
      %v1375 = vunpack.c.l.b16 %v1290
      %v1376 = vunpack.c.l.b16 %v1291
      %v1377 = vunpack.c.l.b16 %v1292
      %v1378 = vunpack.c.l.b16 %v1293
      %v1379 = vunpack.c.l.b16 %v1294
      %v1380 = vunpack.c.l.b16 %v1295
      %v1381 = vunpack.c.l.b16 %v1296
      %v1382 = vunpack.c.l.b16 %v1297
      %v1383 = vunpack.c.l.b16 %v1298
      %v1384 = vunpack.c.l.b16 %v1299
      %v1385 = vunpack.c.l.b16 %v1300
      %v1386 = vunpack.c.l.b16 %v1301
      %v1387 = vunpack.c.l.b16 %v1302
      %v1388 = vunpack.c.l.b16 %v1303
      %v1389 = vpack.c.b16 %v1358, %v1357
      %v1390 = vpack.c.b16 %v1360, %v1359
      %v1391 = vpack.c.b16 %v1362, %v1361
      %v1392 = vpack.c.b16 %v1364, %v1363
      %v1393 = vpack.c.b16 %v1366, %v1365
      %v1394 = vpack.c.b16 %v1368, %v1367
      %v1395 = vpack.c.b16 %v1370, %v1369
      %v1396 = vpack.c.b16 %v1372, %v1371
      %v1397 = vpack.c.b16 %v1374, %v1373
      %v1398 = vpack.c.b16 %v1376, %v1375
      %v1399 = vpack.c.b16 %v1378, %v1377
      %v1400 = vpack.c.b16 %v1380, %v1379
      %v1401 = vpack.c.b16 %v1382, %v1381
      %v1402 = vpack.c.b16 %v1384, %v1383
      %v1403 = vpack.c.b16 %v1386, %v1385
      %v1404 = vpack.c.b16 %v1388, %v1387
      %1421 = vmatprep.subr.bf16.mxu0 0
      %1422 = vmatpush1.bf16.msra.mxu0 %v1389
      %1423 = vmatprep.subr.bf16.mxu0 0
      %1424 = vmatpush1.bf16.msra.mxu0 %v1390
      %1425 = vmatprep.subr.bf16.mxu0 0
      %1426 = vmatpush1.bf16.msra.mxu0 %v1391
      %1427 = vmatprep.subr.bf16.mxu0 0
      %1428 = vmatpush1.bf16.msra.mxu0 %v1392
      %1429 = vmatprep.subr.bf16.mxu0 0
      %1430 = vmatpush1.bf16.msra.mxu0 %v1393
      %1431 = vmatprep.subr.bf16.mxu0 0
      %1432 = vmatpush1.bf16.msra.mxu0 %v1394
      %1433 = vmatprep.subr.bf16.mxu0 0
      %1434 = vmatpush1.bf16.msra.mxu0 %v1395
      %1435 = vmatprep.subr.bf16.mxu0 0
      %1436 = vmatpush1.bf16.msra.mxu0 %v1396
      %1437 = vmatprep.subr.bf16.mxu0 0
      %1438 = vmatpush1.bf16.msra.mxu0 %v1397
      %1439 = vmatprep.subr.bf16.mxu0 0
      %1440 = vmatpush1.bf16.msra.mxu0 %v1398
      %1441 = vmatprep.subr.bf16.mxu0 0
      %1442 = vmatpush1.bf16.msra.mxu0 %v1399
      %1443 = vmatprep.subr.bf16.mxu0 0
      %1444 = vmatpush1.bf16.msra.mxu0 %v1400
      %1445 = vmatprep.subr.bf16.mxu0 0
      %1446 = vmatpush1.bf16.msra.mxu0 %v1401
      %1447 = vmatprep.subr.bf16.mxu0 0
      %1448 = vmatpush1.bf16.msra.mxu0 %v1402
      %1449 = vmatprep.subr.bf16.mxu0 0
      %1450 = vmatpush1.bf16.msra.mxu0 %v1403
      %1451 = vmatprep.subr.bf16.mxu0 0
      %1452 = vmatpush1.bf16.msra.mxu0 %v1404
      %1453 = vmatprep.mubr.bf16.mxu0 %v1322
      %1454 = vmatmul.mubr.bf16.gmra.mrb[0].mxu0 %v1315
      %v1455 = vpop.f32.mrb[0].mxu0
      %v1456 = vadd.f32 0.0, %v1455
      %v1457 = vpop.f32.mrb[0].mxu0
      %v1458 = vpop.f32.mrb[0].mxu0
      %v1459 = vpop.f32.mrb[0].mxu0
      %1460 = vdwg.mxu0
      %v1461 = vadd.f32 %v1269, %v1456
      %v1462 = vsub.f32 0.0, %v1461
      %v1463 = vmul.f32 %v1462, 1.442695
      %v1464 = vpow.pop %v1463
      %v1465 = vadd.f32 %v1464, 1.0
      %v1466 = vrcp.pop %v1465
      %vm1467 = vcmask 519168
      %1468 = vst.msk [vmem:[%s222] sm:$0xf] %vm1467, %v1466
      %p1469 = scmp.lt.s32.totalorder %s16, 1
      %s1470 = scalar_select %p1469, %s16, 1
      %s1471 = smul.addr %s1470, 4
      %s1472 = scalar_lea.vmem %s5, %s1471
      // Predicated region
      $region41: #{color_encoder_forward.1} parent=39 // pred_check
        %p1473 = pneg %p144
      $region42: #{color_encoder_forward.1} parent=39 // pred_check_branch
        %1475 = sbr.rel (%p1473) target = $region44
      $region43: #{color_encoder_forward.1} parent=39 // pred_region
        _
      $region44: #{color_encoder_forward.1} parent=39 // pred_fallthru
        _
    $region40: #{color_encoder_forward.1} parent=5 // pred_fallthru
      _
    %p1476 = scmp.le.s32.totalorder 2, %s11
    // Predicated region
    $region45: #{color_encoder_forward.1} parent=5 // pred_check
      %p1477 = pneg %p1476
    $region46: #{color_encoder_forward.1} parent=5 // pred_check_branch
      %1479 = sbr.rel (%p1477) target = $region48
    $region47: #{color_encoder_forward.1} parent=5 // pred_region
      %s1480 = ssub.s32 %s11, 2
      // Predicated region
      $region49: #{color_encoder_forward.1} parent=47 // pred_check
        %p1481 = pneg %p150
      $region50: #{color_encoder_forward.1} parent=47 // pred_check_branch
        %1483 = sbr.rel (%p1481) target = $region52
      $region51: #{color_encoder_forward.1} parent=47 // pred_region
        %p1484 = scmp.lt.s32.totalorder %s17, 1
        %s1485 = scalar_select %p1484, %s17, 1
        %s1486 = smul.addr %s1485, 4
        %s1487 = scalar_lea.vmem %s5, %s1486
      $region52: #{color_encoder_forward.1} parent=47 // pred_fallthru
        _
    $region48: #{color_encoder_forward.1} parent=5 // pred_fallthru
      _
  $region6: #{color_encoder_forward.1} parent=0 // loop_footer
    %s15 = sadd.s32 1, %s11
  $region7: #{color_encoder_forward.1} parent=0 // loop_footer_branch
    %10 = sbr.rel target = $region3
  $region8: #{color_encoder_forward.1} parent=0 // loop_exit
    _

</llo_original>
